<compile_context>
chip_gen: v6e
topology: v6e:2x2x1
jax: 0.10.0
libtpu: 0.0.40
codegen_flags: <defaults>
</compile_context>

<pallas_src>
import jax
import jax.numpy as jnp
from jax.experimental import pallas as pl
from jax.experimental.pallas import tpu as pltpu


def _cdiv(a, b):
    return -(-a // b)


def _round_up(x, m):
    return ((x + m - 1) // m) * m


# ------------------------------ Pallas kernel -------------------------------

def _affinity_kernel(counts_ref,                       # SMEM (2,) int32 (prefetch)
                     src_nodes_ref, w_src_ref, b_src_ref,
                     dst_nodes_ref, w_dst_ref, b_dst_ref,
                     e_feat_ref, w_e_ref, b_e_ref,
                     idx_ref,
                     o_ref,
                     h_src_scr, h_dst_scr, acc_scr):
    p = pl.program_id(0)            # affinity path (0 = inter_l2p, 1 = inter_p2l)
    c = pl.program_id(1)            # parallel edge chunk (megacore load balance)
    t = pl.program_id(2)            # edge tile within the chunk (reduction axis)
    n_t = pl.num_programs(2)

    te = acc_scr.shape[1]           # edge tile size (lane axis)
    count = counts_ref[p]           # number of real edges for this path
    chunk_start = c * n_t * te
    tile_start = chunk_start + t * te

    # ---- chunk init: zero the [H, TE] accumulator (pure-VPU per-tile adds).
    @pl.when(t == 0)
    def _():
        acc_scr[...] = jnp.zeros_like(acc_scr)

    # ---- node projections, once per (path, chunk), only if the chunk owns at
    #      least one real edge.  h^T = W^T @ x^T + b^T, kept resident in VMEM.
    @pl.when((t == 0) & (chunk_start < count))
    def _():
        h_src_scr[...] = (jnp.dot(w_src_ref[0], src_nodes_ref[0],
                                  preferred_element_type=jnp.float32)
                          + b_src_ref[0])
        h_dst_scr[...] = (jnp.dot(w_dst_ref[0], dst_nodes_ref[0],
                                  preferred_element_type=jnp.float32)
                          + b_dst_ref[0])

    # ---- per-tile work; fully padded tiles are skipped outright.
    @pl.when(tile_start < count)
    def _():
        # fc_w-folded edge projection on the MXU: [H,Fe] @ [Fe,TE] + [H,1]
        e_proj = (jnp.dot(w_e_ref[0], e_feat_ref[0],
                          preferred_element_type=jnp.float32) + b_e_ref[0])

        # Gather projected node rows via one-hot matmul, lane axis = edges.
        # Padded edges carry a sentinel index >= n_pad -> all-zero one-hot
        # column -> zero contribution (no explicit mask needed).
        idx = idx_ref[0]                                           # [2, TE]
        n_pad = h_src_scr.shape[1]
        node_iota = jax.lax.broadcasted_iota(jnp.int32, (n_pad, te), 0)
        src_oh = (node_iota == idx[0:1, :]).astype(jnp.float32)    # [N, TE]
        dst_oh = (node_iota == idx[1:2, :]).astype(jnp.float32)
        src_h = jnp.dot(h_src_scr[...], src_oh,
                        preferred_element_type=jnp.float32)        # [H, TE]
        dst_h = jnp.dot(h_dst_scr[...], dst_oh,
                        preferred_element_type=jnp.float32)

        # three-way interaction, accumulated in lane-dense [H, TE] layout.
        acc_scr[...] = acc_scr[...] + e_proj * src_h * dst_h

    # ---- chunk finalize: one cross-lane reduce, broadcast into the lane-dense
    #      (8, 128) output slab for this (path, chunk).
    @pl.when(t == n_t - 1)
    def _():
        o_ref[...] = jnp.zeros_like(o_ref) + jnp.sum(acc_scr[...])


def _affinity_pallas(counts, src_nodes, w_src, b_src, dst_nodes, w_dst, b_dst,
                     e_feat, w_e, b_e, idx,
                     *, edge_tile, num_chunks, tiles_per_chunk):
    n_paths, node_f, n_pad = src_nodes.shape
    hid = w_src.shape[1]
    edge_f = e_feat.shape[1]
    tpc = tiles_per_chunk

    # Per-path constant blocks (weights, biases, node tables); only re-fetched
    # when the path index changes.
    # NOTE: at production node counts, add `pipeline_mode=pl.Buffered(1)` to
    # these specs to drop the pointless double buffer; at these toy sizes the
    # whole set of constants is < 4 KiB so the default is kept for robustness.
    def const(shape):
        return pl.BlockSpec(shape, lambda p, c, t, cnt: (p, 0, 0))

    # Edge-tiled, lane-dense blocks (auto double-buffered over the tile axis).
    def etile(shape):
        return pl.BlockSpec(shape, lambda p, c, t, cnt: (p, 0, c * tpc + t))

    return pl.pallas_call(
        _affinity_kernel,
        out_shape=jax.ShapeDtypeStruct((n_paths, num_chunks, 8, 128),
                                       jnp.float32),
        grid_spec=pltpu.PrefetchScalarGridSpec(
            num_scalar_prefetch=1,
            grid=(n_paths, num_chunks, tpc),
            in_specs=[
                const((1, node_f, n_pad)),        # src node features^T
                const((1, hid, node_f)),          # W_src^T  ([out, in])
                const((1, hid, 1)),               # b_src^T
                const((1, node_f, n_pad)),        # dst node features^T
                const((1, hid, node_f)),          # W_dst^T
                const((1, hid, 1)),               # b_dst^T
                etile((1, edge_f, edge_tile)),    # edge features^T (lanes=edges)
                const((1, hid, edge_f)),          # fc_w-folded W_edge^T
                const((1, hid, 1)),               # fc_w-folded b_edge^T
                etile((1, 2, edge_tile)),         # packed src/dst indices
            ],
            out_specs=pl.BlockSpec((1, 1, 8, 128),
                                   lambda p, c, t, cnt: (p, c, 0, 0)),
            scratch_shapes=[pltpu.VMEM((hid, n_pad), jnp.float32),       # h_src^T
                            pltpu.VMEM((hid, n_pad), jnp.float32),       # h_dst^T
                            pltpu.VMEM((hid, edge_tile), jnp.float32)],  # acc
        ),
        compiler_params=pltpu.CompilerParams(
            dimension_semantics=("parallel", "parallel", "arbitrary"),
            vmem_limit_bytes=32 * 1024 * 1024),
    )(counts, src_nodes, w_src, b_src, dst_nodes, w_dst, b_dst,
      e_feat, w_e, b_e, idx)


# ------------------------------- module glue --------------------------------

def _init_linear(key, in_dim, out_dim):
    """PyTorch nn.Linear default init; weight stored pre-transposed [in, out]."""
    kw, kb = jax.random.split(key)
    bound = 1.0 / jnp.sqrt(jnp.float32(in_dim))
    w = jax.random.uniform(kw, (in_dim, out_dim), jnp.float32, -bound, bound)
    b = jax.random.uniform(kb, (1, out_dim), jnp.float32, -bound, bound)
    return w, b


def init_params(key, node_feat_size, edge_feat_size, hidden_feat_size):
    names = ["prj_lp_src", "prj_lp_dst", "prj_lp_edge",
             "prj_pl_src", "prj_pl_dst", "prj_pl_edge",
             "fc_lp", "fc_pl"]
    keys = jax.random.split(key, len(names))
    dims = {
        "prj_lp_src": (node_feat_size, hidden_feat_size),
        "prj_lp_dst": (node_feat_size, hidden_feat_size),
        "prj_lp_edge": (edge_feat_size, hidden_feat_size),
        "prj_pl_src": (node_feat_size, hidden_feat_size),
        "prj_pl_dst": (node_feat_size, hidden_feat_size),
        "prj_pl_edge": (edge_feat_size, hidden_feat_size),
        "fc_lp": (hidden_feat_size, 1),
        "fc_pl": (hidden_feat_size, 1),
    }
    return {n: _init_linear(k, *dims[n]) for n, k in zip(names, keys)}


def atom_atom_affinities(params, lig_h, poc_h,
                         lp_edge_feat, lp_src, lp_dst,
                         pl_edge_feat, pl_src, pl_dst,
                         *, edge_tile=512, num_chunks=1):
    """Returns (logit_lp, logit_pl), each [1, 1] (single-graph batch).

    edge_tile:  edge-tile size (lane axis), multiple of 128.  512-2048 is the
                sweet spot; tune per TPU generation (VMEM cost is tiny here).
    num_chunks: parallel edge chunks per path.  Use 2 on v7x so both
                TensorCores split each path's edge range; 1 is fine on
                v5e/v6e (single TensorCore).
    """
    assert edge_tile % 128 == 0
    n_lig, node_f = lig_h.shape
    n_poc = poc_h.shape[0]
    e_lp = lp_edge_feat.shape[0]
    e_pl = pl_edge_feat.shape[0]

    n_pad = _round_up(max(n_lig, n_poc), 8)
    tiles_total = max(1, _cdiv(max(e_lp, e_pl), edge_tile))
    tiles_per_chunk = _cdiv(tiles_total, num_chunks)
    e_pad = num_chunks * tiles_per_chunk * edge_tile

    def padT(x, cols):          # [n, f] -> [f, cols], zero-padded columns
        xt = x.T
        return jnp.pad(xt, ((0, 0), (0, cols - xt.shape[1])))

    lig_t, poc_t = padT(lig_h, n_pad), padT(poc_h, n_pad)

    # path 0 = inter_l2p: edge src = ligand (prj_lp_src), dst = pocket (prj_lp_dst)
    # path 1 = inter_p2l: edge src = pocket (prj_pl_dst), dst = ligand (prj_pl_src)
    src_nodes = jnp.stack([lig_t, poc_t])            # [2, F, N_pad]
    dst_nodes = jnp.stack([poc_t, lig_t])

    def stackT(name_a, name_b):                      # -> W^T [2,H,F], b^T [2,H,1]
        (wa, ba), (wb, bb) = params[name_a], params[name_b]
        return jnp.stack([wa.T, wb.T]), jnp.stack([ba.T, bb.T])

    w_src, b_src = stackT("prj_lp_src", "prj_pl_dst")
    w_dst, b_dst = stackT("prj_lp_dst", "prj_pl_src")

    # Fold fc weights into the edge projection:  sum_h fc_w[h] * i[e, h].
    fcw_lp, fcb_lp = params["fc_lp"]                 # [H,1], [1,1]
    fcw_pl, fcb_pl = params["fc_pl"]
    w_e = jnp.stack([fcw_lp * params["prj_lp_edge"][0].T,      # [H,1]*[H,Fe]
                     fcw_pl * params["prj_pl_edge"][0].T])
    b_e = jnp.stack([fcw_lp * params["prj_lp_edge"][1].T,      # [H,1]*[H,1]
                     fcw_pl * params["prj_pl_edge"][1].T])
    fc_b = jnp.stack([fcb_lp[0, 0], fcb_pl[0, 0]])             # [2]

    e_feat = jnp.stack([padT(lp_edge_feat, e_pad),             # [2, Fe, E_pad]
                        padT(pl_edge_feat, e_pad)])

    # Packed lane-dense indices; the sentinel (= n_pad) marks padded edges and
    # makes their one-hot gather columns all-zero inside the kernel.
    def pack_idx(src, dst):
        m = jnp.full((2, e_pad), n_pad, dtype=jnp.int32)
        m = m.at[0, :src.shape[0]].set(src.astype(jnp.int32))
        m = m.at[1, :dst.shape[0]].set(dst.astype(jnp.int32))
        return m

    idx = jnp.stack([pack_idx(lp_src, lp_dst), pack_idx(pl_src, pl_dst)])
    counts = jnp.array([e_lp, e_pl], dtype=jnp.int32)

    out = _affinity_pallas(counts, src_nodes, w_src, b_src,
                           dst_nodes, w_dst, b_dst,
                           e_feat, w_e, b_e, idx,
                           edge_tile=edge_tile, num_chunks=num_chunks,
                           tiles_per_chunk=tiles_per_chunk)
    # Sum chunk partials and add the fc bias once per *real* edge.
    logits = jnp.sum(out[:, :, 0, 0], axis=1) + counts.astype(jnp.float32) * fc_b
    return logits[0].reshape(1, 1), logits[1].reshape(1, 1)


# ----------------------- pure-JAX reference (checking) ----------------------

def _ref_forward(params, lig_h, poc_h,
                 lp_edge_feat, lp_src, lp_dst,
                 pl_edge_feat, pl_src, pl_dst):
    def lin(x, wb):
        w, b = wb
        return x @ w + b

    h_lig = lin(lig_h, params["prj_lp_src"])
    h_poc = lin(poc_h, params["prj_lp_dst"])
    i = lin(lp_edge_feat, params["prj_lp_edge"]) * h_lig[lp_src] * h_poc[lp_dst]
    logit_lp = jnp.sum(lin(i, params["fc_lp"]), axis=0, keepdims=True)

    h_lig = lin(lig_h, params["prj_pl_src"])
    h_poc = lin(poc_h, params["prj_pl_dst"])
    i = lin(pl_edge_feat, params["prj_pl_edge"]) * h_poc[pl_src] * h_lig[pl_dst]
    logit_pl = jnp.sum(lin(i, params["fc_pl"]), axis=0, keepdims=True)
    return logit_lp, logit_pl


if __name__ == "__main__":
    NODE_F, EDGE_F, HID = 16, 8, 32
    N_LIG, N_POC = 10, 7            # not multiples of 8 -> node padding/sentinel
    E_LP, E_PL = 700, 180           # asymmetric, non-tile-aligned -> exercises
                                    # sentinel masking AND skipped tiles/chunks
    EDGE_TILE, NUM_CHUNKS = 256, 2  # small tile only to exercise multi-tile
                                    # accumulation at toy sizes; use 512-2048
                                    # (per generation) in production

    root = jax.random.PRNGKey(0)
    kp, k1, k2, k3, k4, k5, k6, k7, k8 = jax.random.split(root, 9)

    params = init_params(kp, NODE_F, EDGE_F, HID)

    lig_h = jax.random.normal(k1, (N_LIG, NODE_F), jnp.float32)
    poc_h = jax.random.normal(k2, (N_POC, NODE_F), jnp.float32)
    lp_edge_feat = jax.random.normal(k3, (E_LP, EDGE_F), jnp.float32)
    pl_edge_feat = jax.random.normal(k4, (E_PL, EDGE_F), jnp.float32)
    lp_src = jax.random.randint(k5, (E_LP,), 0, N_LIG)   # ligand indices
    lp_dst = jax.random.randint(k6, (E_LP,), 0, N_POC)   # pocket indices
    pl_src = jax.random.randint(k7, (E_PL,), 0, N_POC)   # pocket indices
    pl_dst = jax.random.randint(k8, (E_PL,), 0, N_LIG)   # ligand indices

    fwd = jax.jit(atom_atom_affinities,
                  static_argnames=("edge_tile", "num_chunks"))
    logit_lp, logit_pl = fwd(params, lig_h, poc_h,
                             lp_edge_feat, lp_src, lp_dst,
                             pl_edge_feat, pl_src, pl_dst,
                             edge_tile=EDGE_TILE, num_chunks=NUM_CHUNKS)
    jax.block_until_ready((logit_lp, logit_pl))

    ref_lp, ref_pl = _ref_forward(params, lig_h, poc_h,
                                  lp_edge_feat, lp_src, lp_dst,
                                  pl_edge_feat, pl_src, pl_dst)
    assert logit_lp.shape == (1, 1) and logit_pl.shape == (1, 1)
    assert jnp.allclose(logit_lp, ref_lp, rtol=1e-3, atol=1e-2), (logit_lp, ref_lp)
    assert jnp.allclose(logit_pl, ref_pl, rtol=1e-3, atol=1e-2), (logit_pl, ref_pl)

    print("KERNEL_OK")
</pallas_src>

<mosaic_0001>
module attributes {stable_mosaic.version = 11 : i64} {
  func.func @_affinity_kernel(%arg0: i32, %arg1: i32, %arg2: i32, %arg3: memref<2xi32, #tpu.memory_space<smem>>, %arg4: memref<1x16x16xf32, #tpu.memory_space<vmem>>, %arg5: memref<1x32x16xf32, #tpu.memory_space<vmem>>, %arg6: memref<1x32x1xf32, #tpu.memory_space<vmem>>, %arg7: memref<1x16x16xf32, #tpu.memory_space<vmem>>, %arg8: memref<1x32x16xf32, #tpu.memory_space<vmem>>, %arg9: memref<1x32x1xf32, #tpu.memory_space<vmem>>, %arg10: memref<1x8x256xf32, #tpu.memory_space<vmem>>, %arg11: memref<1x32x8xf32, #tpu.memory_space<vmem>>, %arg12: memref<1x32x1xf32, #tpu.memory_space<vmem>>, %arg13: memref<1x2x256xi32, #tpu.memory_space<vmem>>, %arg14: memref<1x1x8x128xf32, #tpu.memory_space<vmem>>, %arg15: memref<32x16xf32, #tpu.memory_space<vmem>>, %arg16: memref<32x16xf32, #tpu.memory_space<vmem>>, %arg17: memref<32x256xf32, #tpu.memory_space<vmem>>) attributes {dimension_semantics = [#tpu.dimension_semantics<parallel>, #tpu.dimension_semantics<parallel>, #tpu.dimension_semantics<arbitrary>], iteration_bounds = array<i64: 2, 2, 2>, scalar_prefetch = 1 : i64, scratch_operands = 3 : i64, tpu.core_type = #tpu.core_type<tc>, window_params = [{transform_indices = @transform_0, window_bounds = array<i64: 1, 16, 16>}, {transform_indices = @transform_1, window_bounds = array<i64: 1, 32, 16>}, {transform_indices = @transform_2, window_bounds = array<i64: 1, 32, 1>}, {transform_indices = @transform_3, window_bounds = array<i64: 1, 16, 16>}, {transform_indices = @transform_4, window_bounds = array<i64: 1, 32, 16>}, {transform_indices = @transform_5, window_bounds = array<i64: 1, 32, 1>}, {transform_indices = @transform_6, window_bounds = array<i64: 1, 8, 256>}, {transform_indices = @transform_7, window_bounds = array<i64: 1, 32, 8>}, {transform_indices = @transform_8, window_bounds = array<i64: 1, 32, 1>}, {transform_indices = @transform_9, window_bounds = array<i64: 1, 2, 256>}, {transform_indices = @transform_10, window_bounds = array<i64: 1, 1, 8, 128>}]} {
    %0 = arith.index_cast %arg0 : i32 to index
    %1 = memref.load %arg3[%0] : memref<2xi32, #tpu.memory_space<smem>>
    %c2_i32 = arith.constant 2 : i32
    %2 = arith.muli %arg1, %c2_i32 : i32
    %c256_i32 = arith.constant 256 : i32
    %3 = arith.muli %2, %c256_i32 : i32
    %c256_i32_0 = arith.constant 256 : i32
    %4 = arith.muli %arg2, %c256_i32_0 : i32
    %5 = arith.addi %3, %4 : i32
    %c0_i32 = arith.constant 0 : i32
    %6 = arith.cmpi eq, %arg2, %c0_i32 : i32
    %7 = arith.extui %6 : i1 to i32
    %c0_i32_1 = arith.constant 0 : i32
    %8 = arith.cmpi ne, %7, %c0_i32_1 : i32
    scf.if %8 {
      %cst = arith.constant 0.000000e+00 : f32
      %20 = vector.broadcast %cst : f32 to vector<32x256xf32>
      %c0 = arith.constant 0 : index
      %c0_6 = arith.constant 0 : index
      %21 = vector.load %arg17[%c0, %c0_6] : memref<32x256xf32, #tpu.memory_space<vmem>>, vector<32x256xf32>
      tpu.vector_store %arg17[%c0, %c0_6], %20 {strides = array<i32>} : memref<32x256xf32, #tpu.memory_space<vmem>>, vector<32x256xf32>,
    } else {
    }
    %c0_i32_2 = arith.constant 0 : i32
    %9 = arith.cmpi eq, %arg2, %c0_i32_2 : i32
    %10 = arith.cmpi slt, %3, %1 : i32
    %11 = arith.andi %9, %10 : i1
    %12 = arith.extui %11 : i1 to i32
    %c0_i32_3 = arith.constant 0 : i32
    %13 = arith.cmpi ne, %12, %c0_i32_3 : i32
    scf.if %13 {
      %c0 = arith.constant 0 : index
      %c0_6 = arith.constant 0 : index
      %c0_7 = arith.constant 0 : index
      %20 = vector.load %arg5[%c0, %c0_6, %c0_7] : memref<1x32x16xf32, #tpu.memory_space<vmem>>, vector<1x32x16xf32>
      %21 = vector.shape_cast %20 : vector<1x32x16xf32> to vector<32x16xf32>
      %c0_8 = arith.constant 0 : index
      %c0_9 = arith.constant 0 : index
      %c0_10 = arith.constant 0 : index
      %22 = vector.load %arg4[%c0_8, %c0_9, %c0_10] : memref<1x16x16xf32, #tpu.memory_space<vmem>>, vector<1x16x16xf32>
      %23 = vector.shape_cast %22 : vector<1x16x16xf32> to vector<16x16xf32>
      %cst = arith.constant dense<0.000000e+00> : vector<32x16xf32>
      %24 = tpu.matmul %21, %23, %cst {dimension_numbers = #tpu.dot_dimension_numbers<[1], [0], [0], [1], [0, 0, 1, 1], [], []>} : vector<32x16xf32>, vector<16x16xf32>, vector<32x16xf32> -> vector<32x16xf32>
      %c0_11 = arith.constant 0 : index
      %c0_12 = arith.constant 0 : index
      %c0_13 = arith.constant 0 : index
      %25 = vector.load %arg6[%c0_11, %c0_12, %c0_13] : memref<1x32x1xf32, #tpu.memory_space<vmem>>, vector<1x32x1xf32>
      %26 = vector.shape_cast %25 : vector<1x32x1xf32> to vector<32x1xf32>
      %27 = vector.broadcast %26 : vector<32x1xf32> to vector<32x16xf32>
      %28 = arith.addf %24, %27 : vector<32x16xf32>
      %c0_14 = arith.constant 0 : index
      %c0_15 = arith.constant 0 : index
      %29 = vector.load %arg15[%c0_14, %c0_15] : memref<32x16xf32, #tpu.memory_space<vmem>>, vector<32x16xf32>
      tpu.vector_store %arg15[%c0_14, %c0_15], %28 {strides = array<i32>} : memref<32x16xf32, #tpu.memory_space<vmem>>, vector<32x16xf32>,
      %c0_16 = arith.constant 0 : index
      %c0_17 = arith.constant 0 : index
      %c0_18 = arith.constant 0 : index
      %30 = vector.load %arg8[%c0_16, %c0_17, %c0_18] : memref<1x32x16xf32, #tpu.memory_space<vmem>>, vector<1x32x16xf32>
      %31 = vector.shape_cast %30 : vector<1x32x16xf32> to vector<32x16xf32>
      %c0_19 = arith.constant 0 : index
      %c0_20 = arith.constant 0 : index
      %c0_21 = arith.constant 0 : index
      %32 = vector.load %arg7[%c0_19, %c0_20, %c0_21] : memref<1x16x16xf32, #tpu.memory_space<vmem>>, vector<1x16x16xf32>
      %33 = vector.shape_cast %32 : vector<1x16x16xf32> to vector<16x16xf32>
      %cst_22 = arith.constant dense<0.000000e+00> : vector<32x16xf32>
      %34 = tpu.matmul %31, %33, %cst_22 {dimension_numbers = #tpu.dot_dimension_numbers<[1], [0], [0], [1], [0, 0, 1, 1], [], []>} : vector<32x16xf32>, vector<16x16xf32>, vector<32x16xf32> -> vector<32x16xf32>
      %c0_23 = arith.constant 0 : index
      %c0_24 = arith.constant 0 : index
      %c0_25 = arith.constant 0 : index
      %35 = vector.load %arg9[%c0_23, %c0_24, %c0_25] : memref<1x32x1xf32, #tpu.memory_space<vmem>>, vector<1x32x1xf32>
      %36 = vector.shape_cast %35 : vector<1x32x1xf32> to vector<32x1xf32>
      %37 = vector.broadcast %36 : vector<32x1xf32> to vector<32x16xf32>
      %38 = arith.addf %34, %37 : vector<32x16xf32>
      %c0_26 = arith.constant 0 : index
      %c0_27 = arith.constant 0 : index
      %39 = vector.load %arg16[%c0_26, %c0_27] : memref<32x16xf32, #tpu.memory_space<vmem>>, vector<32x16xf32>
      tpu.vector_store %arg16[%c0_26, %c0_27], %38 {strides = array<i32>} : memref<32x16xf32, #tpu.memory_space<vmem>>, vector<32x16xf32>,
    } else {
    }
    %14 = arith.cmpi slt, %5, %1 : i32
    %15 = arith.extui %14 : i1 to i32
    %c0_i32_4 = arith.constant 0 : i32
    %16 = arith.cmpi ne, %15, %c0_i32_4 : i32
    scf.if %16 {
      %c0 = arith.constant 0 : index
      %c0_6 = arith.constant 0 : index
      %c0_7 = arith.constant 0 : index
      %20 = vector.load %arg11[%c0, %c0_6, %c0_7] : memref<1x32x8xf32, #tpu.memory_space<vmem>>, vector<1x32x8xf32>
      %21 = vector.shape_cast %20 : vector<1x32x8xf32> to vector<32x8xf32>
      %c0_8 = arith.constant 0 : index
      %c0_9 = arith.constant 0 : index
      %c0_10 = arith.constant 0 : index
      %22 = vector.load %arg10[%c0_8, %c0_9, %c0_10] : memref<1x8x256xf32, #tpu.memory_space<vmem>>, vector<1x8x256xf32>
      %23 = vector.shape_cast %22 : vector<1x8x256xf32> to vector<8x256xf32>
      %cst = arith.constant dense<0.000000e+00> : vector<32x256xf32>
      %24 = tpu.matmul %21, %23, %cst {dimension_numbers = #tpu.dot_dimension_numbers<[1], [0], [0], [1], [0, 0, 1, 1], [], []>} : vector<32x8xf32>, vector<8x256xf32>, vector<32x256xf32> -> vector<32x256xf32>
      %c0_11 = arith.constant 0 : index
      %c0_12 = arith.constant 0 : index
      %c0_13 = arith.constant 0 : index
      %25 = vector.load %arg12[%c0_11, %c0_12, %c0_13] : memref<1x32x1xf32, #tpu.memory_space<vmem>>, vector<1x32x1xf32>
      %26 = vector.shape_cast %25 : vector<1x32x1xf32> to vector<32x1xf32>
      %27 = vector.broadcast %26 : vector<32x1xf32> to vector<32x256xf32>
      %28 = arith.addf %24, %27 : vector<32x256xf32>
      %c0_14 = arith.constant 0 : index
      %c0_15 = arith.constant 0 : index
      %c0_16 = arith.constant 0 : index
      %29 = vector.load %arg13[%c0_14, %c0_15, %c0_16] : memref<1x2x256xi32, #tpu.memory_space<vmem>>, vector<1x2x256xi32>
      %30 = vector.shape_cast %29 : vector<1x2x256xi32> to vector<2x256xi32>
      %31 = tpu.iota {dimensions = array<i32: 0>} : vector<16x256xi32>
      %32 = vector.extract_strided_slice %30 {offsets = [0, 0], sizes = [1, 256], strides = [1, 1]} : vector<2x256xi32> to vector<1x256xi32>
      %33 = vector.broadcast %32 : vector<1x256xi32> to vector<16x256xi32>
      %34 = arith.cmpi eq, %31, %33 : vector<16x256xi32>
      %35 = arith.extui %34 : vector<16x256xi1> to vector<16x256xi32>
      %36 = arith.sitofp %35 : vector<16x256xi32> to vector<16x256xf32>
      %37 = vector.extract_strided_slice %30 {offsets = [1, 0], sizes = [1, 256], strides = [1, 1]} : vector<2x256xi32> to vector<1x256xi32>
      %38 = vector.broadcast %37 : vector<1x256xi32> to vector<16x256xi32>
      %39 = arith.cmpi eq, %31, %38 : vector<16x256xi32>
      %40 = arith.extui %39 : vector<16x256xi1> to vector<16x256xi32>
      %41 = arith.sitofp %40 : vector<16x256xi32> to vector<16x256xf32>
      %c0_17 = arith.constant 0 : index
      %c0_18 = arith.constant 0 : index
      %42 = vector.load %arg15[%c0_17, %c0_18] : memref<32x16xf32, #tpu.memory_space<vmem>>, vector<32x16xf32>
      %cst_19 = arith.constant dense<0.000000e+00> : vector<32x256xf32>
      %43 = tpu.matmul %42, %36, %cst_19 {dimension_numbers = #tpu.dot_dimension_numbers<[1], [0], [0], [1], [0, 0, 1, 1], [], []>} : vector<32x16xf32>, vector<16x256xf32>, vector<32x256xf32> -> vector<32x256xf32>
      %c0_20 = arith.constant 0 : index
      %c0_21 = arith.constant 0 : index
      %44 = vector.load %arg16[%c0_20, %c0_21] : memref<32x16xf32, #tpu.memory_space<vmem>>, vector<32x16xf32>
      %cst_22 = arith.constant dense<0.000000e+00> : vector<32x256xf32>
      %45 = tpu.matmul %44, %41, %cst_22 {dimension_numbers = #tpu.dot_dimension_numbers<[1], [0], [0], [1], [0, 0, 1, 1], [], []>} : vector<32x16xf32>, vector<16x256xf32>, vector<32x256xf32> -> vector<32x256xf32>
      %c0_23 = arith.constant 0 : index
      %c0_24 = arith.constant 0 : index
      %46 = vector.load %arg17[%c0_23, %c0_24] : memref<32x256xf32, #tpu.memory_space<vmem>>, vector<32x256xf32>
      %47 = arith.mulf %28, %43 : vector<32x256xf32>
      %48 = arith.mulf %47, %45 : vector<32x256xf32>
      %49 = arith.addf %46, %48 : vector<32x256xf32>
      %c0_25 = arith.constant 0 : index
      %c0_26 = arith.constant 0 : index
      %50 = vector.load %arg17[%c0_25, %c0_26] : memref<32x256xf32, #tpu.memory_space<vmem>>, vector<32x256xf32>
      tpu.vector_store %arg17[%c0_25, %c0_26], %49 {strides = array<i32>} : memref<32x256xf32, #tpu.memory_space<vmem>>, vector<32x256xf32>,
    } else {
    }
    %c1_i32 = arith.constant 1 : i32
    %17 = arith.cmpi eq, %arg2, %c1_i32 : i32
    %18 = arith.extui %17 : i1 to i32
    %c0_i32_5 = arith.constant 0 : i32
    %19 = arith.cmpi ne, %18, %c0_i32_5 : i32
    scf.if %19 {
      %cst = arith.constant 0.000000e+00 : f32
      %20 = vector.broadcast %cst : f32 to vector<1x1x8x128xf32>
      %c0 = arith.constant 0 : index
      %c0_6 = arith.constant 0 : index
      %21 = vector.load %arg17[%c0, %c0_6] : memref<32x256xf32, #tpu.memory_space<vmem>>, vector<32x256xf32>
      %22 = vector.shape_cast %21 : vector<32x256xf32> to vector<1x32x256xf32>
      %cst_7 = arith.constant dense<0.000000e+00> : vector<1xf32>
      %23 = vector.multi_reduction <add>, %22, %cst_7 [1, 2] : vector<1x32x256xf32> to vector<1xf32>
      %24 = vector.shape_cast %23 : vector<1xf32> to vector<1x1x1xf32>
      %25 = vector.extract %24[0, 0, 0] : f32 from vector<1x1x1xf32>
      %26 = vector.broadcast %25 : f32 to vector<1x1x8x128xf32>
      %27 = arith.addf %20, %26 : vector<1x1x8x128xf32>
      %c0_8 = arith.constant 0 : index
      %c0_9 = arith.constant 0 : index
      %c0_10 = arith.constant 0 : index
      %c0_11 = arith.constant 0 : index
      %28 = vector.load %arg14[%c0_8, %c0_9, %c0_10, %c0_11] : memref<1x1x8x128xf32, #tpu.memory_space<vmem>>, vector<1x1x8x128xf32>
      tpu.vector_store %arg14[%c0_8, %c0_9, %c0_10, %c0_11], %27 {strides = array<i32>} : memref<1x1x8x128xf32, #tpu.memory_space<vmem>>, vector<1x1x8x128xf32>,
    } else {
    }
    return
  }
  func.func @transform_0(%arg0: i32, %arg1: i32, %arg2: i32, %arg3: memref<2xi32, #tpu.memory_space<smem>>) -> (i32, i32, i32) {
    %c0_i32 = arith.constant 0 : i32
    %c0_i32_0 = arith.constant 0 : i32
    %c0_i32_1 = arith.constant 0 : i32
    return %arg0, %c0_i32, %c0_i32_0 : i32, i32, i32
  }
  func.func @transform_1(%arg0: i32, %arg1: i32, %arg2: i32, %arg3: memref<2xi32, #tpu.memory_space<smem>>) -> (i32, i32, i32) {
    %c0_i32 = arith.constant 0 : i32
    %c0_i32_0 = arith.constant 0 : i32
    %c0_i32_1 = arith.constant 0 : i32
    return %arg0, %c0_i32, %c0_i32_0 : i32, i32, i32
  }
  func.func @transform_2(%arg0: i32, %arg1: i32, %arg2: i32, %arg3: memref<2xi32, #tpu.memory_space<smem>>) -> (i32, i32, i32) {
    %c0_i32 = arith.constant 0 : i32
    %c0_i32_0 = arith.constant 0 : i32
    %c0_i32_1 = arith.constant 0 : i32
    return %arg0, %c0_i32, %c0_i32_0 : i32, i32, i32
  }
  func.func @transform_3(%arg0: i32, %arg1: i32, %arg2: i32, %arg3: memref<2xi32, #tpu.memory_space<smem>>) -> (i32, i32, i32) {
    %c0_i32 = arith.constant 0 : i32
    %c0_i32_0 = arith.constant 0 : i32
    %c0_i32_1 = arith.constant 0 : i32
    return %arg0, %c0_i32, %c0_i32_0 : i32, i32, i32
  }
  func.func @transform_4(%arg0: i32, %arg1: i32, %arg2: i32, %arg3: memref<2xi32, #tpu.memory_space<smem>>) -> (i32, i32, i32) {
    %c0_i32 = arith.constant 0 : i32
    %c0_i32_0 = arith.constant 0 : i32
    %c0_i32_1 = arith.constant 0 : i32
    return %arg0, %c0_i32, %c0_i32_0 : i32, i32, i32
  }
  func.func @transform_5(%arg0: i32, %arg1: i32, %arg2: i32, %arg3: memref<2xi32, #tpu.memory_space<smem>>) -> (i32, i32, i32) {
    %c0_i32 = arith.constant 0 : i32
    %c0_i32_0 = arith.constant 0 : i32
    %c0_i32_1 = arith.constant 0 : i32
    return %arg0, %c0_i32, %c0_i32_0 : i32, i32, i32
  }
  func.func @transform_6(%arg0: i32, %arg1: i32, %arg2: i32, %arg3: memref<2xi32, #tpu.memory_space<smem>>) -> (i32, i32, i32) {
    %c2_i32 = arith.constant 2 : i32
    %0 = arith.muli %arg1, %c2_i32 : i32
    %1 = arith.addi %0, %arg2 : i32
    %c0_i32 = arith.constant 0 : i32
    %c0_i32_0 = arith.constant 0 : i32
    return %arg0, %c0_i32, %1 : i32, i32, i32
  }
  func.func @transform_7(%arg0: i32, %arg1: i32, %arg2: i32, %arg3: memref<2xi32, #tpu.memory_space<smem>>) -> (i32, i32, i32) {
    %c0_i32 = arith.constant 0 : i32
    %c0_i32_0 = arith.constant 0 : i32
    %c0_i32_1 = arith.constant 0 : i32
    return %arg0, %c0_i32, %c0_i32_0 : i32, i32, i32
  }
  func.func @transform_8(%arg0: i32, %arg1: i32, %arg2: i32, %arg3: memref<2xi32, #tpu.memory_space<smem>>) -> (i32, i32, i32) {
    %c0_i32 = arith.constant 0 : i32
    %c0_i32_0 = arith.constant 0 : i32
    %c0_i32_1 = arith.constant 0 : i32
    return %arg0, %c0_i32, %c0_i32_0 : i32, i32, i32
  }
  func.func @transform_9(%arg0: i32, %arg1: i32, %arg2: i32, %arg3: memref<2xi32, #tpu.memory_space<smem>>) -> (i32, i32, i32) {
    %c2_i32 = arith.constant 2 : i32
    %0 = arith.muli %arg1, %c2_i32 : i32
    %1 = arith.addi %0, %arg2 : i32
    %c0_i32 = arith.constant 0 : i32
    %c0_i32_0 = arith.constant 0 : i32
    return %arg0, %c0_i32, %1 : i32, i32, i32
  }
  func.func @transform_10(%arg0: i32, %arg1: i32, %arg2: i32, %arg3: memref<2xi32, #tpu.memory_space<smem>>) -> (i32, i32, i32, i32) {
    %c0_i32 = arith.constant 0 : i32
    %c0_i32_0 = arith.constant 0 : i32
    %c0_i32_1 = arith.constant 0 : i32
    return %arg0, %arg1, %c0_i32, %c0_i32_0 : i32, i32, i32, i32
  }
}

</mosaic_0001>

<llo_original>
// kernel: atom_atom_affinities.1
$region0: #{atom_atom_affinities.1}
  #allocation0 [shape = 'u32[]', space=smem, size = 0x4, offset = 0x4, fixed_abs, tag = 'smem constant byte address 0x4 - core index']
  #allocation1 [shape = 'u32[144,128]{1,0:T(1,128)}', space=vmem, size = 0x12000, scoped, tag = 'internal scratch']
  #allocation2 [shape = 'f32[32,16]{1,0:T(8,128)}', space=vmem, size = 0x4000, scoped, tag = 'scratch operand']
  #allocation3 [shape = 'f32[32,16]{1,0:T(8,128)}', space=vmem, size = 0x4000, scoped, tag = 'scratch operand']
  #allocation4 [shape = 'f32[32,256]{1,0:T(8,128)}', space=vmem, size = 0x8000, scoped, tag = 'scratch operand']
  #allocation5 [shape = 's32[1]{0}', space=sflag, size = 0x4, scoped, tag = 'scoped memory for atom_atom_affinities.1']
  #allocation6 [shape = 'u8[512]{0}', space=smem, size = 0x200, scoped, tag = 'prefetched SMEM operand 0']
  %s0 = inlined_call_operand.vmem [shape: s32[2], index: 0, kind: input, shape index: {}]
  %s1 = inlined_call_operand.vmem [shape: f32[2,16,16], index: 1, kind: input, shape index: {}]
  %s2 = inlined_call_operand.vmem [shape: f32[2,32,16], index: 2, kind: input, shape index: {}]
  %s3 = inlined_call_operand.vmem [shape: f32[2,32,1], index: 3, kind: input, shape index: {}]
  %s4 = inlined_call_operand.vmem [shape: f32[2,16,16], index: 4, kind: input, shape index: {}]
  %s5 = inlined_call_operand.vmem [shape: f32[2,32,16], index: 5, kind: input, shape index: {}]
  %s6 = inlined_call_operand.vmem [shape: f32[2,32,1], index: 6, kind: input, shape index: {}]
  %s7 = inlined_call_operand.vmem [shape: f32[2,8,1024], index: 7, kind: input, shape index: {}]
  %s8 = inlined_call_operand.vmem [shape: f32[2,32,8], index: 8, kind: input, shape index: {}]
  %s9 = inlined_call_operand.vmem [shape: f32[2,32,1], index: 9, kind: input, shape index: {}]
  %s10 = inlined_call_operand.vmem [shape: s32[2,2,1024], index: 10, kind: input, shape index: {}]
  %s11 = inlined_call_operand.vmem [shape: f32[2,2,8,128], index: 11, kind: output, shape index: {}]
  %s12 = sld [smem:[#allocation0]]
  $region89: #{atom_atom_affinities.1} parent=0
    _
  %s14 = ssub.s32 1, %s12
  %s15 = scalar_select 0, %s14, %s12
  %s16 = sshll.u32 %s0, 4
  %s17 = int_to_ptr.vmem [resolvable:$true] %s16
  %19 = dma.vmem_to_smem %s17, 16, [#allocation6], [#allocation5]
  %20 = dma.done [#allocation5], 16
  %21 = sfence
  loop: start=0, step=1, limit=10
  $region2: #{atom_atom_affinities.1} parent=0 // loop_pre_header
    _
  $region3: #{atom_atom_affinities.1} parent=0 // loop_header
    %s23 = sphi 0, %s27
    %p24 = scmp.ge.s32.totalorder %s23, 10
    %s30 = sphi 0, %s49
    %s31 = sphi 0, %s45
    %s32 = sphi 0, %s41
    %s33 = sphi 0, %s30
    %s34 = sphi 0, %s31
    %s35 = sphi 0, %s32
    %s36 = sphi 0, %s33
    %s37 = sphi 0, %s34
    %s38 = sphi 0, %s35
    %s52 = sphi 0, %s54
    %s55 = sphi 0, %s52
    %s56 = sphi 0, %s55
    %s72 = sphi 0, %s56
    %s78 = sphi 0, %s80
    %s81 = sphi 0, %s78
    %s82 = sphi 0, %s81
    %s98 = sphi 0, %s82
    %s104 = sphi 0, %s106
    %s107 = sphi 0, %s104
    %s108 = sphi 0, %s107
    %s124 = sphi 0, %s108
    %s130 = sphi 0, %s132
    %s133 = sphi 0, %s130
    %s134 = sphi 0, %s133
    %s150 = sphi 0, %s134
    %s156 = sphi 0, %s158
    %s159 = sphi 0, %s156
    %s160 = sphi 0, %s159
    %s176 = sphi 0, %s160
    %s182 = sphi 0, %s184
    %s185 = sphi 0, %s182
    %s186 = sphi 0, %s185
    %s202 = sphi 0, %s186
    %s214 = sphi 0, %s216
    %s217 = sphi 0, %s214
    %s218 = sphi 0, %s217
    %s234 = sphi 0, %s218
    %s240 = sphi 0, %s242
    %s243 = sphi 0, %s240
    %s244 = sphi 0, %s243
    %s260 = sphi 0, %s244
    %s266 = sphi 0, %s268
    %s269 = sphi 0, %s266
    %s270 = sphi 0, %s269
    %s286 = sphi 0, %s270
    %s298 = sphi 0, %s300
    %s301 = sphi 0, %s298
    %s302 = sphi 0, %s301
    %s318 = sphi 0, %s302
    %s326 = sphi 0, %s328
    %s329 = sphi 0, %s326
    %s330 = sphi 0, %s329
    %s346 = sphi 0, %s330
  $region4: #{atom_atom_affinities.1} parent=0 // loop_header_branch
    %26 = sbr.rel (%p24) target = $region8
  $region5: #{atom_atom_affinities.1} parent=0 // loop_body
    %s28 = ssub.s32 %s23, 1
    %s29 = ssub.s32 %s23, 2
    %s39 = sadd.s32 1, %s32
    %p40 = scmp.ge.s32.totalorder %s39, 2
    %s41 = scalar_select %p40, 0, %s39
    %s42 = sadd.s32 1, %s31
    %s43 = scalar_select %p40, %s42, %s31
    %p44 = scmp.ge.s32.totalorder %s43, 2
    %s45 = scalar_select %p44, 0, %s43
    %s46 = sadd.s32 1, %s30
    %s47 = scalar_select %p44, %s46, %s30
    %p48 = scmp.ge.s32.totalorder %s47, 2
    %s49 = scalar_select %p48, 0, %s47
    %s50 = ssub.s32 %s30, %s49
    %p51 = scmp.eq.s32.totalorder %s50, 0
    %s53 = sadd.s32 %s52, 1
    %s54 = scalar_select %p51, %s52, %s53
    %p57 = pneg %p51
    %p58 = scmp.eq.s32.totalorder %s23, 7
    %p59 = por %p57, %p58
    %p60 = scmp.ne.s32.totalorder %s52, %s55
    %p61 = scmp.eq.s32.totalorder %s23, 0
    %p62 = por %p60, %p61
    %p63 = scmp.ne.s32.totalorder %s52, %s55
    %p64 = scmp.eq.s32.totalorder %s28, 7
    %p65 = por %p63, %p64
    %p66 = scmp.ne.s32.totalorder %s55, %s56
    %p67 = scmp.eq.s32.totalorder %s28, 0
    %p68 = por %p66, %p67
    %p69 = scmp.ne.s32.totalorder %s55, %s56
    %p70 = scmp.eq.s32.totalorder %s29, 7
    %p71 = por %p69, %p70
    %p73 = scmp.ne.s32.totalorder %s56, %s72
    %p74 = scmp.eq.s32.totalorder %s29, 0
    %p75 = por %p73, %p74
    %s76 = ssub.s32 %s30, %s49
    %p77 = scmp.eq.s32.totalorder %s76, 0
    %s79 = sadd.s32 %s78, 1
    %s80 = scalar_select %p77, %s78, %s79
    %p83 = pneg %p77
    %p84 = scmp.eq.s32.totalorder %s23, 7
    %p85 = por %p83, %p84
    %p86 = scmp.ne.s32.totalorder %s78, %s81
    %p87 = scmp.eq.s32.totalorder %s23, 0
    %p88 = por %p86, %p87
    %p89 = scmp.ne.s32.totalorder %s78, %s81
    %p90 = scmp.eq.s32.totalorder %s28, 7
    %p91 = por %p89, %p90
    %p92 = scmp.ne.s32.totalorder %s81, %s82
    %p93 = scmp.eq.s32.totalorder %s28, 0
    %p94 = por %p92, %p93
    %p95 = scmp.ne.s32.totalorder %s81, %s82
    %p96 = scmp.eq.s32.totalorder %s29, 7
    %p97 = por %p95, %p96
    %p99 = scmp.ne.s32.totalorder %s82, %s98
    %p100 = scmp.eq.s32.totalorder %s29, 0
    %p101 = por %p99, %p100
    %s102 = ssub.s32 %s30, %s49
    %p103 = scmp.eq.s32.totalorder %s102, 0
    %s105 = sadd.s32 %s104, 1
    %s106 = scalar_select %p103, %s104, %s105
    %p109 = pneg %p103
    %p110 = scmp.eq.s32.totalorder %s23, 7
    %p111 = por %p109, %p110
    %p112 = scmp.ne.s32.totalorder %s104, %s107
    %p113 = scmp.eq.s32.totalorder %s23, 0
    %p114 = por %p112, %p113
    %p115 = scmp.ne.s32.totalorder %s104, %s107
    %p116 = scmp.eq.s32.totalorder %s28, 7
    %p117 = por %p115, %p116
    %p118 = scmp.ne.s32.totalorder %s107, %s108
    %p119 = scmp.eq.s32.totalorder %s28, 0
    %p120 = por %p118, %p119
    %p121 = scmp.ne.s32.totalorder %s107, %s108
    %p122 = scmp.eq.s32.totalorder %s29, 7
    %p123 = por %p121, %p122
    %p125 = scmp.ne.s32.totalorder %s108, %s124
    %p126 = scmp.eq.s32.totalorder %s29, 0
    %p127 = por %p125, %p126
    %s128 = ssub.s32 %s30, %s49
    %p129 = scmp.eq.s32.totalorder %s128, 0
    %s131 = sadd.s32 %s130, 1
    %s132 = scalar_select %p129, %s130, %s131
    %p135 = pneg %p129
    %p136 = scmp.eq.s32.totalorder %s23, 7
    %p137 = por %p135, %p136
    %p138 = scmp.ne.s32.totalorder %s130, %s133
    %p139 = scmp.eq.s32.totalorder %s23, 0
    %p140 = por %p138, %p139
    %p141 = scmp.ne.s32.totalorder %s130, %s133
    %p142 = scmp.eq.s32.totalorder %s28, 7
    %p143 = por %p141, %p142
    %p144 = scmp.ne.s32.totalorder %s133, %s134
    %p145 = scmp.eq.s32.totalorder %s28, 0
    %p146 = por %p144, %p145
    %p147 = scmp.ne.s32.totalorder %s133, %s134
    %p148 = scmp.eq.s32.totalorder %s29, 7
    %p149 = por %p147, %p148
    %p151 = scmp.ne.s32.totalorder %s134, %s150
    %p152 = scmp.eq.s32.totalorder %s29, 0
    %p153 = por %p151, %p152
    %s154 = ssub.s32 %s30, %s49
    %p155 = scmp.eq.s32.totalorder %s154, 0
    %s157 = sadd.s32 %s156, 1
    %s158 = scalar_select %p155, %s156, %s157
    %p161 = pneg %p155
    %p162 = scmp.eq.s32.totalorder %s23, 7
    %p163 = por %p161, %p162
    %p164 = scmp.ne.s32.totalorder %s156, %s159
    %p165 = scmp.eq.s32.totalorder %s23, 0
    %p166 = por %p164, %p165
    %p167 = scmp.ne.s32.totalorder %s156, %s159
    %p168 = scmp.eq.s32.totalorder %s28, 7
    %p169 = por %p167, %p168
    %p170 = scmp.ne.s32.totalorder %s159, %s160
    %p171 = scmp.eq.s32.totalorder %s28, 0
    %p172 = por %p170, %p171
    %p173 = scmp.ne.s32.totalorder %s159, %s160
    %p174 = scmp.eq.s32.totalorder %s29, 7
    %p175 = por %p173, %p174
    %p177 = scmp.ne.s32.totalorder %s160, %s176
    %p178 = scmp.eq.s32.totalorder %s29, 0
    %p179 = por %p177, %p178
    %s180 = ssub.s32 %s30, %s49
    %p181 = scmp.eq.s32.totalorder %s180, 0
    %s183 = sadd.s32 %s182, 1
    %s184 = scalar_select %p181, %s182, %s183
    %p187 = pneg %p181
    %p188 = scmp.eq.s32.totalorder %s23, 7
    %p189 = por %p187, %p188
    %p190 = scmp.ne.s32.totalorder %s182, %s185
    %p191 = scmp.eq.s32.totalorder %s23, 0
    %p192 = por %p190, %p191
    %p193 = scmp.ne.s32.totalorder %s182, %s185
    %p194 = scmp.eq.s32.totalorder %s28, 7
    %p195 = por %p193, %p194
    %p196 = scmp.ne.s32.totalorder %s185, %s186
    %p197 = scmp.eq.s32.totalorder %s28, 0
    %p198 = por %p196, %p197
    %p199 = scmp.ne.s32.totalorder %s185, %s186
    %p200 = scmp.eq.s32.totalorder %s29, 7
    %p201 = por %p199, %p200
    %p203 = scmp.ne.s32.totalorder %s186, %s202
    %p204 = scmp.eq.s32.totalorder %s29, 0
    %p205 = por %p203, %p204
    %s206 = smul.u32 %s31, 2
    %s207 = sadd.s32 %s206, %s32
    %s208 = smul.u32 %s45, 2
    %s209 = sadd.s32 %s208, %s41
    %s210 = ssub.s32 %s30, %s49
    %s211 = ssub.s32 %s207, %s209
    %s212 = sor.u32 %s210, %s211
    %p213 = scmp.eq.s32.totalorder %s212, 0
    %s215 = sadd.s32 %s214, 1
    %s216 = scalar_select %p213, %s214, %s215
    %p219 = pneg %p213
    %p220 = scmp.eq.s32.totalorder %s23, 7
    %p221 = por %p219, %p220
    %p222 = scmp.ne.s32.totalorder %s214, %s217
    %p223 = scmp.eq.s32.totalorder %s23, 0
    %p224 = por %p222, %p223
    %p225 = scmp.ne.s32.totalorder %s214, %s217
    %p226 = scmp.eq.s32.totalorder %s28, 7
    %p227 = por %p225, %p226
    %p228 = scmp.ne.s32.totalorder %s217, %s218
    %p229 = scmp.eq.s32.totalorder %s28, 0
    %p230 = por %p228, %p229
    %p231 = scmp.ne.s32.totalorder %s217, %s218
    %p232 = scmp.eq.s32.totalorder %s29, 7
    %p233 = por %p231, %p232
    %p235 = scmp.ne.s32.totalorder %s218, %s234
    %p236 = scmp.eq.s32.totalorder %s29, 0
    %p237 = por %p235, %p236
    %s238 = ssub.s32 %s30, %s49
    %p239 = scmp.eq.s32.totalorder %s238, 0
    %s241 = sadd.s32 %s240, 1
    %s242 = scalar_select %p239, %s240, %s241
    %p245 = pneg %p239
    %p246 = scmp.eq.s32.totalorder %s23, 7
    %p247 = por %p245, %p246
    %p248 = scmp.ne.s32.totalorder %s240, %s243
    %p249 = scmp.eq.s32.totalorder %s23, 0
    %p250 = por %p248, %p249
    %p251 = scmp.ne.s32.totalorder %s240, %s243
    %p252 = scmp.eq.s32.totalorder %s28, 7
    %p253 = por %p251, %p252
    %p254 = scmp.ne.s32.totalorder %s243, %s244
    %p255 = scmp.eq.s32.totalorder %s28, 0
    %p256 = por %p254, %p255
    %p257 = scmp.ne.s32.totalorder %s243, %s244
    %p258 = scmp.eq.s32.totalorder %s29, 7
    %p259 = por %p257, %p258
    %p261 = scmp.ne.s32.totalorder %s244, %s260
    %p262 = scmp.eq.s32.totalorder %s29, 0
    %p263 = por %p261, %p262
    %s264 = ssub.s32 %s30, %s49
    %p265 = scmp.eq.s32.totalorder %s264, 0
    %s267 = sadd.s32 %s266, 1
    %s268 = scalar_select %p265, %s266, %s267
    %p271 = pneg %p265
    %p272 = scmp.eq.s32.totalorder %s23, 7
    %p273 = por %p271, %p272
    %p274 = scmp.ne.s32.totalorder %s266, %s269
    %p275 = scmp.eq.s32.totalorder %s23, 0
    %p276 = por %p274, %p275
    %p277 = scmp.ne.s32.totalorder %s266, %s269
    %p278 = scmp.eq.s32.totalorder %s28, 7
    %p279 = por %p277, %p278
    %p280 = scmp.ne.s32.totalorder %s269, %s270
    %p281 = scmp.eq.s32.totalorder %s28, 0
    %p282 = por %p280, %p281
    %p283 = scmp.ne.s32.totalorder %s269, %s270
    %p284 = scmp.eq.s32.totalorder %s29, 7
    %p285 = por %p283, %p284
    %p287 = scmp.ne.s32.totalorder %s270, %s286
    %p288 = scmp.eq.s32.totalorder %s29, 0
    %p289 = por %p287, %p288
    %s290 = smul.u32 %s31, 2
    %s291 = sadd.s32 %s290, %s32
    %s292 = smul.u32 %s45, 2
    %s293 = sadd.s32 %s292, %s41
    %s294 = ssub.s32 %s30, %s49
    %s295 = ssub.s32 %s291, %s293
    %s296 = sor.u32 %s294, %s295
    %p297 = scmp.eq.s32.totalorder %s296, 0
    %s299 = sadd.s32 %s298, 1
    %s300 = scalar_select %p297, %s298, %s299
    %p303 = pneg %p297
    %p304 = scmp.eq.s32.totalorder %s23, 7
    %p305 = por %p303, %p304
    %p306 = scmp.ne.s32.totalorder %s298, %s301
    %p307 = scmp.eq.s32.totalorder %s23, 0
    %p308 = por %p306, %p307
    %p309 = scmp.ne.s32.totalorder %s298, %s301
    %p310 = scmp.eq.s32.totalorder %s28, 7
    %p311 = por %p309, %p310
    %p312 = scmp.ne.s32.totalorder %s301, %s302
    %p313 = scmp.eq.s32.totalorder %s28, 0
    %p314 = por %p312, %p313
    %p315 = scmp.ne.s32.totalorder %s301, %s302
    %p316 = scmp.eq.s32.totalorder %s29, 7
    %p317 = por %p315, %p316
    %p319 = scmp.ne.s32.totalorder %s302, %s318
    %p320 = scmp.eq.s32.totalorder %s29, 0
    %p321 = por %p319, %p320
    %s322 = ssub.s32 %s30, %s49
    %s323 = ssub.s32 %s31, %s45
    %s324 = sor.u32 %s322, %s323
    %p325 = scmp.eq.s32.totalorder %s324, 0
    %s327 = sadd.s32 %s326, 1
    %s328 = scalar_select %p325, %s326, %s327
    %p331 = pneg %p325
    %p332 = scmp.eq.s32.totalorder %s23, 7
    %p333 = por %p331, %p332
    %p334 = scmp.ne.s32.totalorder %s326, %s329
    %p335 = scmp.eq.s32.totalorder %s23, 0
    %p336 = por %p334, %p335
    %p337 = scmp.ne.s32.totalorder %s326, %s329
    %p338 = scmp.eq.s32.totalorder %s28, 7
    %p339 = por %p337, %p338
    %p340 = scmp.ne.s32.totalorder %s329, %s330
    %p341 = scmp.eq.s32.totalorder %s28, 0
    %p342 = por %p340, %p341
    %p343 = scmp.ne.s32.totalorder %s329, %s330
    %p344 = scmp.eq.s32.totalorder %s29, 7
    %p345 = por %p343, %p344
    %p347 = scmp.ne.s32.totalorder %s330, %s346
    %p348 = scmp.eq.s32.totalorder %s29, 0
    %p349 = por %p347, %p348
    %p350 = scmp.le.s32.totalorder 1, %s23
    %p351 = scmp.lt.s32.totalorder %s23, 9
    %p352 = pnand %p350, %p351
    %p353 = pneg %p352
    // Predicated region
    $region9: #{atom_atom_affinities.1} parent=5 // pred_check
      _
    $region10: #{atom_atom_affinities.1} parent=5 // pred_check_branch
      %355 = sbr.rel (%p352) target = $region12
    $region11: #{atom_atom_affinities.1} parent=5 // pred_region
      %s356 = ssub.s32 %s23, 1
    $region12: #{atom_atom_affinities.1} parent=5 // pred_fallthru
      _
    %p357 = scmp.lt.s32.totalorder %s23, 8
    // Predicated region
    $region13: #{atom_atom_affinities.1} parent=5 // pred_check
      %p358 = pneg %p357
    $region14: #{atom_atom_affinities.1} parent=5 // pred_check_branch
      %360 = sbr.rel (%p358) target = $region16
    $region15: #{atom_atom_affinities.1} parent=5 // pred_region
      // Predicated region
      $region17: #{atom_atom_affinities.1} parent=15 // pred_check
        %p361 = pneg %p62
      $region18: #{atom_atom_affinities.1} parent=15 // pred_check_branch
        %363 = sbr.rel (%p361) target = $region20
      $region19: #{atom_atom_affinities.1} parent=15 // pred_region
        %p364 = scmp.lt.s32.totalorder %s30, 1
        %s365 = scalar_select %p364, %s30, 1
        %s366 = smul.addr %s365, 2
        %s367 = smul.addr %s366, 8
        %s368 = scalar_lea.vmem %s1, %s367
      $region20: #{atom_atom_affinities.1} parent=15 // pred_fallthru
        _
      // Predicated region
      $region21: #{atom_atom_affinities.1} parent=15 // pred_check
        %p369 = pneg %p88
      $region22: #{atom_atom_affinities.1} parent=15 // pred_check_branch
        %371 = sbr.rel (%p369) target = $region24
      $region23: #{atom_atom_affinities.1} parent=15 // pred_region
        %p372 = scmp.lt.s32.totalorder %s30, 1
        %s373 = scalar_select %p372, %s30, 1
        %s374 = smul.addr %s373, 4
        %s375 = smul.addr %s374, 8
        %s376 = scalar_lea.vmem %s2, %s375
      $region24: #{atom_atom_affinities.1} parent=15 // pred_fallthru
        _
      // Predicated region
      $region25: #{atom_atom_affinities.1} parent=15 // pred_check
        %p377 = pneg %p114
      $region26: #{atom_atom_affinities.1} parent=15 // pred_check_branch
        %379 = sbr.rel (%p377) target = $region28
      $region27: #{atom_atom_affinities.1} parent=15 // pred_region
        %p380 = scmp.lt.s32.totalorder %s30, 1
        %s381 = scalar_select %p380, %s30, 1
        %s382 = smul.addr %s381, 4
        %s383 = smul.addr %s382, 8
        %s384 = scalar_lea.vmem %s3, %s383
      $region28: #{atom_atom_affinities.1} parent=15 // pred_fallthru
        _
      // Predicated region
      $region29: #{atom_atom_affinities.1} parent=15 // pred_check
        %p385 = pneg %p140
      $region30: #{atom_atom_affinities.1} parent=15 // pred_check_branch
        %387 = sbr.rel (%p385) target = $region32
      $region31: #{atom_atom_affinities.1} parent=15 // pred_region
        %p388 = scmp.lt.s32.totalorder %s30, 1
        %s389 = scalar_select %p388, %s30, 1
        %s390 = smul.addr %s389, 2
        %s391 = smul.addr %s390, 8
        %s392 = scalar_lea.vmem %s4, %s391
      $region32: #{atom_atom_affinities.1} parent=15 // pred_fallthru
        _
      // Predicated region
      $region33: #{atom_atom_affinities.1} parent=15 // pred_check
        %p393 = pneg %p166
      $region34: #{atom_atom_affinities.1} parent=15 // pred_check_branch
        %395 = sbr.rel (%p393) target = $region36
      $region35: #{atom_atom_affinities.1} parent=15 // pred_region
        %p396 = scmp.lt.s32.totalorder %s30, 1
        %s397 = scalar_select %p396, %s30, 1
        %s398 = smul.addr %s397, 4
        %s399 = smul.addr %s398, 8
        %s400 = scalar_lea.vmem %s5, %s399
      $region36: #{atom_atom_affinities.1} parent=15 // pred_fallthru
        _
      // Predicated region
      $region37: #{atom_atom_affinities.1} parent=15 // pred_check
        %p401 = pneg %p192
      $region38: #{atom_atom_affinities.1} parent=15 // pred_check_branch
        %403 = sbr.rel (%p401) target = $region40
      $region39: #{atom_atom_affinities.1} parent=15 // pred_region
        %p404 = scmp.lt.s32.totalorder %s30, 1
        %s405 = scalar_select %p404, %s30, 1
        %s406 = smul.addr %s405, 4
        %s407 = smul.addr %s406, 8
        %s408 = scalar_lea.vmem %s6, %s407
      $region40: #{atom_atom_affinities.1} parent=15 // pred_fallthru
        _
      // Predicated region
      $region41: #{atom_atom_affinities.1} parent=15 // pred_check
        %p409 = pneg %p224
      $region42: #{atom_atom_affinities.1} parent=15 // pred_check_branch
        %411 = sbr.rel (%p409) target = $region44
      $region43: #{atom_atom_affinities.1} parent=15 // pred_region
        %s412 = smul.u32 %s31, 2
        %s413 = sadd.s32 %s412, %s32
        %s414 = smul.u32 2, %s413
        %p415 = scmp.lt.s32.totalorder %s30, 1
        %s416 = scalar_select %p415, %s30, 1
        %p417 = scmp.lt.s32.totalorder %s414, 7
        %s418 = scalar_select %p417, %s414, 7
        %s419 = smul.addr %s416, 8
        %s420 = sadd.s32 %s418, %s419
        %s421 = smul.addr %s420, 8
        %s422 = scalar_lea.vmem %s7, %s421
        %s423 = smul.u32 %s31, 2
        %s424 = sadd.s32 %s423, %s32
        %s425 = smul.u32 2, %s424
      $region44: #{atom_atom_affinities.1} parent=15 // pred_fallthru
        _
      // Predicated region
      $region45: #{atom_atom_affinities.1} parent=15 // pred_check
        %p426 = pneg %p250
      $region46: #{atom_atom_affinities.1} parent=15 // pred_check_branch
        %428 = sbr.rel (%p426) target = $region48
      $region47: #{atom_atom_affinities.1} parent=15 // pred_region
        %p429 = scmp.lt.s32.totalorder %s30, 1
        %s430 = scalar_select %p429, %s30, 1
        %s431 = smul.addr %s430, 4
        %s432 = smul.addr %s431, 8
        %s433 = scalar_lea.vmem %s8, %s432
      $region48: #{atom_atom_affinities.1} parent=15 // pred_fallthru
        _
      // Predicated region
      $region49: #{atom_atom_affinities.1} parent=15 // pred_check
        %p434 = pneg %p276
      $region50: #{atom_atom_affinities.1} parent=15 // pred_check_branch
        %436 = sbr.rel (%p434) target = $region52
      $region51: #{atom_atom_affinities.1} parent=15 // pred_region
        %p437 = scmp.lt.s32.totalorder %s30, 1
        %s438 = scalar_select %p437, %s30, 1
        %s439 = smul.addr %s438, 4
        %s440 = smul.addr %s439, 8
        %s441 = scalar_lea.vmem %s9, %s440
      $region52: #{atom_atom_affinities.1} parent=15 // pred_fallthru
        _
      // Predicated region
      $region53: #{atom_atom_affinities.1} parent=15 // pred_check
        %p442 = pneg %p308
      $region54: #{atom_atom_affinities.1} parent=15 // pred_check_branch
        %444 = sbr.rel (%p442) target = $region56
      $region55: #{atom_atom_affinities.1} parent=15 // pred_region
        %s445 = smul.u32 %s31, 2
        %s446 = sadd.s32 %s445, %s32
        %s447 = smul.u32 2, %s446
        %p448 = scmp.lt.s32.totalorder %s30, 1
        %s449 = scalar_select %p448, %s30, 1
        %p450 = scmp.lt.s32.totalorder %s447, 7
        %s451 = scalar_select %p450, %s447, 7
        %s452 = smul.addr %s449, 8
        %s453 = sadd.s32 %s451, %s452
        %s454 = smul.addr %s453, 2
        %s455 = scalar_lea.vmem %s10, %s454
        %s456 = smul.u32 %s31, 2
        %s457 = sadd.s32 %s456, %s32
        %s458 = smul.u32 2, %s457
      $region56: #{atom_atom_affinities.1} parent=15 // pred_fallthru
        _
    $region16: #{atom_atom_affinities.1} parent=5 // pred_fallthru
      _
    %p459 = scmp.le.s32.totalorder 1, %s23
    %p460 = scmp.lt.s32.totalorder %s23, 9
    %p461 = pnand %p459, %p460
    %p462 = pneg %p461
    // Predicated region
    $region57: #{atom_atom_affinities.1} parent=5 // pred_check
      _
    $region58: #{atom_atom_affinities.1} parent=5 // pred_check_branch
      %464 = sbr.rel (%p461) target = $region60
    $region59: #{atom_atom_affinities.1} parent=5 // pred_region
      %s465 = ssub.s32 %s23, 1
      %p466 = scmp.lt.s32.totalorder %s33, 1
      %s467 = scalar_select %p466, %s33, 1
      %s468 = smul.addr %s467, 2
      %s469 = smul.addr %s468, 8
      %s470 = scalar_lea.vmem %s1, %s469
      %p471 = pneg %p68
      %p472 = pneg %p65
      %p473 = scmp.lt.s32.totalorder %s33, 1
      %s474 = scalar_select %p473, %s33, 1
      %s475 = smul.addr %s474, 4
      %s476 = smul.addr %s475, 8
      %s477 = scalar_lea.vmem %s2, %s476
      %p478 = pneg %p94
      %p479 = pneg %p91
      %p480 = scmp.lt.s32.totalorder %s33, 1
      %s481 = scalar_select %p480, %s33, 1
      %s482 = smul.addr %s481, 4
      %s483 = smul.addr %s482, 8
      %s484 = scalar_lea.vmem %s3, %s483
      %p485 = pneg %p120
      %p486 = pneg %p117
      %p487 = scmp.lt.s32.totalorder %s33, 1
      %s488 = scalar_select %p487, %s33, 1
      %s489 = smul.addr %s488, 2
      %s490 = smul.addr %s489, 8
      %s491 = scalar_lea.vmem %s4, %s490
      %p492 = pneg %p146
      %p493 = pneg %p143
      %p494 = scmp.lt.s32.totalorder %s33, 1
      %s495 = scalar_select %p494, %s33, 1
      %s496 = smul.addr %s495, 4
      %s497 = smul.addr %s496, 8
      %s498 = scalar_lea.vmem %s5, %s497
      %p499 = pneg %p172
      %p500 = pneg %p169
      %p501 = scmp.lt.s32.totalorder %s33, 1
      %s502 = scalar_select %p501, %s33, 1
      %s503 = smul.addr %s502, 4
      %s504 = smul.addr %s503, 8
      %s505 = scalar_lea.vmem %s6, %s504
      %p506 = pneg %p198
      %p507 = pneg %p195
      %s508 = smul.u32 %s34, 2
      %s509 = sadd.s32 %s508, %s35
      %s510 = smul.u32 2, %s509
      %p511 = scmp.lt.s32.totalorder %s33, 1
      %s512 = scalar_select %p511, %s33, 1
      %p513 = scmp.lt.s32.totalorder %s510, 7
      %s514 = scalar_select %p513, %s510, 7
      %s515 = smul.addr %s512, 8
      %s516 = sadd.s32 %s514, %s515
      %s517 = smul.addr %s516, 8
      %s518 = scalar_lea.vmem %s7, %s517
      %p519 = pneg %p230
      %p520 = pneg %p227
      %p521 = scmp.lt.s32.totalorder %s33, 1
      %s522 = scalar_select %p521, %s33, 1
      %s523 = smul.addr %s522, 4
      %s524 = smul.addr %s523, 8
      %s525 = scalar_lea.vmem %s8, %s524
      %p526 = pneg %p256
      %p527 = pneg %p253
      %p528 = scmp.lt.s32.totalorder %s33, 1
      %s529 = scalar_select %p528, %s33, 1
      %s530 = smul.addr %s529, 4
      %s531 = smul.addr %s530, 8
      %s532 = scalar_lea.vmem %s9, %s531
      %p533 = pneg %p282
      %p534 = pneg %p279
      %s535 = smul.u32 %s34, 2
      %s536 = sadd.s32 %s535, %s35
      %s537 = smul.u32 2, %s536
      %p538 = scmp.lt.s32.totalorder %s33, 1
      %s539 = scalar_select %p538, %s33, 1
      %p540 = scmp.lt.s32.totalorder %s537, 7
      %s541 = scalar_select %p540, %s537, 7
      %s542 = smul.addr %s539, 8
      %s543 = sadd.s32 %s541, %s542
      %s544 = smul.addr %s543, 2
      %s545 = scalar_lea.vmem %s10, %s544
      %p546 = pneg %p314
      %p547 = pneg %p311
      %p548 = pneg %p342
      %p549 = pneg %p339
      %p550 = scmp.lt.s32.totalorder %s33, 1
      %s551 = scalar_select %p550, %s33, 1
      %p552 = scmp.lt.s32.totalorder %s34, 1
      %s553 = scalar_select %p552, %s34, 1
      %s554 = smul.addr %s551, 2
      %s555 = sadd.s32 %s553, %s554
      %s556 = smul.addr %s555, 8
      %s557 = scalar_lea.vmem %s11, %s556
      %p558 = scmp.lt.s32.totalorder %s33, 1
      %s559 = scalar_select %p558, %s33, 1
      %s560 = smul.addr %s559, 2
      %s561 = smul.addr %s560, 8
      %s562 = scalar_lea.vmem %s1, %s561
      %p563 = scmp.lt.s32.totalorder %s33, 1
      %s564 = scalar_select %p563, %s33, 1
      %s565 = smul.addr %s564, 4
      %s566 = smul.addr %s565, 8
      %s567 = scalar_lea.vmem %s2, %s566
      %p568 = scmp.lt.s32.totalorder %s33, 1
      %s569 = scalar_select %p568, %s33, 1
      %s570 = smul.addr %s569, 4
      %s571 = smul.addr %s570, 8
      %s572 = scalar_lea.vmem %s3, %s571
      %p573 = scmp.lt.s32.totalorder %s33, 1
      %s574 = scalar_select %p573, %s33, 1
      %s575 = smul.addr %s574, 2
      %s576 = smul.addr %s575, 8
      %s577 = scalar_lea.vmem %s4, %s576
      %p578 = scmp.lt.s32.totalorder %s33, 1
      %s579 = scalar_select %p578, %s33, 1
      %s580 = smul.addr %s579, 4
      %s581 = smul.addr %s580, 8
      %s582 = scalar_lea.vmem %s5, %s581
      %p583 = scmp.lt.s32.totalorder %s33, 1
      %s584 = scalar_select %p583, %s33, 1
      %s585 = smul.addr %s584, 4
      %s586 = smul.addr %s585, 8
      %s587 = scalar_lea.vmem %s6, %s586
      %s588 = smul.u32 %s34, 2
      %s589 = sadd.s32 %s588, %s35
      %s590 = smul.u32 2, %s589
      %p591 = scmp.lt.s32.totalorder %s33, 1
      %s592 = scalar_select %p591, %s33, 1
      %p593 = scmp.lt.s32.totalorder %s590, 7
      %s594 = scalar_select %p593, %s590, 7
      %s595 = smul.addr %s592, 8
      %s596 = sadd.s32 %s594, %s595
      %s597 = smul.addr %s596, 8
      %s598 = scalar_lea.vmem %s7, %s597
      %s599 = smul.u32 %s34, 2
      %s600 = sadd.s32 %s599, %s35
      %s601 = smul.u32 2, %s600
      %p602 = scmp.lt.s32.totalorder %s33, 1
      %s603 = scalar_select %p602, %s33, 1
      %s604 = smul.addr %s603, 4
      %s605 = smul.addr %s604, 8
      %s606 = scalar_lea.vmem %s8, %s605
      %p607 = scmp.lt.s32.totalorder %s33, 1
      %s608 = scalar_select %p607, %s33, 1
      %s609 = smul.addr %s608, 4
      %s610 = smul.addr %s609, 8
      %s611 = scalar_lea.vmem %s9, %s610
      %s612 = smul.u32 %s34, 2
      %s613 = sadd.s32 %s612, %s35
      %s614 = smul.u32 2, %s613
      %p615 = scmp.lt.s32.totalorder %s33, 1
      %s616 = scalar_select %p615, %s33, 1
      %p617 = scmp.lt.s32.totalorder %s614, 7
      %s618 = scalar_select %p617, %s614, 7
      %s619 = smul.addr %s616, 8
      %s620 = sadd.s32 %s618, %s619
      %s621 = smul.addr %s620, 2
      %s622 = scalar_lea.vmem %s10, %s621
      %s623 = smul.u32 %s34, 2
      %s624 = sadd.s32 %s623, %s35
      %s625 = smul.u32 2, %s624
      %p626 = scmp.lt.s32.totalorder %s33, 1
      %s627 = scalar_select %p626, %s33, 1
      %p628 = scmp.lt.s32.totalorder %s34, 1
      %s629 = scalar_select %p628, %s34, 1
      %s630 = smul.addr %s627, 2
      %s631 = sadd.s32 %s629, %s630
      %s632 = smul.addr %s631, 8
      %s633 = scalar_lea.vmem %s11, %s632
      %s634 = sld [smem:[#allocation6 + %s33]]
      %s635 = smul.u32 %s34, 512
      %s636 = smul.u32 %s35, 256
      %s637 = sadd.s32 %s635, %s636
      %p638 = scmp.eq.s32.totalorder %s35, 0
      // Predicated region
      $region61: #{atom_atom_affinities.1} parent=59 // pred_check
        %p639 = pneg %p638
      $region62: #{atom_atom_affinities.1} parent=59 // pred_check_branch
        %641 = sbr.rel (%p639) target = $region64
      $region63: #{atom_atom_affinities.1} parent=59 // pred_region
        %642 = vst [vmem:[#allocation4] sm:$0xff] 0.0
        %643 = vst [vmem:[#allocation4 + $0x8] sm:$0xff] 0.0
        %644 = vst [vmem:[#allocation4 + $0x10] sm:$0xff] 0.0
        %645 = vst [vmem:[#allocation4 + $0x18] sm:$0xff] 0.0
        %646 = vst [vmem:[#allocation4 + $0x20] sm:$0xff] 0.0
        %647 = vst [vmem:[#allocation4 + $0x28] sm:$0xff] 0.0
        %648 = vst [vmem:[#allocation4 + $0x30] sm:$0xff] 0.0
        %649 = vst [vmem:[#allocation4 + $0x38] sm:$0xff] 0.0
      $region64: #{atom_atom_affinities.1} parent=59 // pred_fallthru
        _
      %p650 = scmp.lt.s32.totalorder %s635, %s634
      %p651 = pnand %p638, %p650
      %p652 = pneg %p651
      // Predicated region
      $region65: #{atom_atom_affinities.1} parent=59 // pred_check
        _
      $region66: #{atom_atom_affinities.1} parent=59 // pred_check_branch
        %654 = sbr.rel (%p651) target = $region68
      $region67: #{atom_atom_affinities.1} parent=59 // pred_region
        %v655 = vld [vmem:[%s567] sm:$0xff]
        %v656 = vld [vmem:[%s567 + $0x8] sm:$0xff]
        %v657 = vld [vmem:[%s567 + $0x10] sm:$0xff]
        %v658 = vld [vmem:[%s567 + $0x18] sm:$0xff]
        %v659 = vld [vmem:[%s562] sm:$0xff]
        %v660 = vld [vmem:[%s562 + $0x8] sm:$0xff]
        %v661 = vld [vmem:[%s572] sm:$0xff]
        %v662 = vld [vmem:[%s572 + $0x8] sm:$0xff]
        %v663 = vld [vmem:[%s572 + $0x10] sm:$0xff]
        %v664 = vld [vmem:[%s572 + $0x18] sm:$0xff]
        %666 = vset.pattern.permute.xlu0 0
        %667 = vperm.xlu0 %666, %v661
        %v668 = vpop.permute.xlu0 %667
        %671 = vset.pattern.permute.xlu0 0
        %672 = vperm.xlu0 %671, %v662
        %v673 = vpop.permute.xlu0 %672
        %676 = vset.pattern.permute.xlu0 0
        %677 = vperm.xlu0 %676, %v663
        %v678 = vpop.permute.xlu0 %677
        %681 = vset.pattern.permute.xlu0 0
        %682 = vperm.xlu0 %681, %v664
        %v683 = vpop.permute.xlu0 %682
        %vm685 = vcmask 130048
        %v687 = vsel %vm685, %v655, 0
        %v690 = vsel %vm685, %v656, 0
        %v693 = vsel %vm685, %v657, 0
        %v696 = vsel %vm685, %v658, 0
        %698 = vmatprep.subr.mxu0 0.0
        %699 = vmatpush1.msra.mxu0 0.0
        %700 = vmatprep.subr.mxu0 0.0
        %701 = vmatpush1.msra.mxu0 0.0
        %702 = vmatprep.subr.mxu0 0.0
        %703 = vmatpush1.msra.mxu0 0.0
        %704 = vmatprep.subr.mxu0 0.0
        %705 = vmatpush1.msra.mxu0 0.0
        %706 = vmatprep.subr.mxu0 0.0
        %707 = vmatpush1.msra.mxu0 0.0
        %708 = vmatprep.subr.mxu0 0.0
        %709 = vmatpush1.msra.mxu0 0.0
        %710 = vmatprep.subr.mxu0 0.0
        %711 = vmatpush1.msra.mxu0 0.0
        %712 = vmatprep.subr.mxu0 0.0
        %713 = vmatpush1.msra.mxu0 0.0
        %714 = vmatprep.subr.mxu0 0.0
        %715 = vmatpush1.msra.mxu0 0.0
        %716 = vmatprep.subr.mxu0 0.0
        %717 = vmatpush1.msra.mxu0 0.0
        %718 = vmatprep.subr.mxu0 0.0
        %719 = vmatpush1.msra.mxu0 0.0
        %720 = vmatprep.subr.mxu0 0.0
        %721 = vmatpush1.msra.mxu0 0.0
        %722 = vmatprep.subr.mxu0 0.0
        %723 = vmatpush1.msra.mxu0 0.0
        %724 = vmatprep.subr.mxu0 0.0
        %725 = vmatpush1.msra.mxu0 0.0
        %726 = vmatprep.subr.mxu0 0.0
        %727 = vmatpush1.msra.mxu0 %v660
        %728 = vmatprep.subr.mxu0 0.0
        %729 = vmatpush1.msra.mxu0 %v659
        %730 = vmatprep.subr.mxu0 0.0
        %731 = vmatpush2.msra.mxu0 0.0
        %732 = vmatprep.subr.mxu0 0.0
        %733 = vmatpush2.msra.mxu0 0.0
        %734 = vmatprep.subr.mxu0 0.0
        %735 = vmatpush2.msra.mxu0 0.0
        %736 = vmatprep.subr.mxu0 0.0
        %737 = vmatpush2.msra.mxu0 0.0
        %738 = vmatprep.subr.mxu0 0.0
        %739 = vmatpush2.msra.mxu0 0.0
        %740 = vmatprep.subr.mxu0 0.0
        %741 = vmatpush2.msra.mxu0 0.0
        %742 = vmatprep.subr.mxu0 0.0
        %743 = vmatpush2.msra.mxu0 0.0
        %744 = vmatprep.subr.mxu0 0.0
        %745 = vmatpush2.msra.mxu0 0.0
        %746 = vmatprep.subr.mxu0 0.0
        %747 = vmatpush2.msra.mxu0 0.0
        %748 = vmatprep.subr.mxu0 0.0
        %749 = vmatpush2.msra.mxu0 0.0
        %750 = vmatprep.subr.mxu0 0.0
        %751 = vmatpush2.msra.mxu0 0.0
        %752 = vmatprep.subr.mxu0 0.0
        %753 = vmatpush2.msra.mxu0 0.0
        %754 = vmatprep.subr.mxu0 0.0
        %755 = vmatpush2.msra.mxu0 0.0
        %756 = vmatprep.subr.mxu0 0.0
        %757 = vmatpush2.msra.mxu0 0.0
        %758 = vmatprep.subr.mxu0 0.0
        %759 = vmatpush2.msra.mxu0 0.0
        %760 = vmatprep.subr.mxu0 0.0
        %761 = vmatpush2.msra.mxu0 0.0
        %762 = vmatprep.mubr.f32.mxu0 0.0
        %763 = vmatmul.mubr.f32.gmra.mxu0 %v687
        %v764 = vpop.f32.mrf.mxu0
        %v765 = vadd.f32 %v668, %v764
        %v766 = vpop.f32.mrf.mxu0
        %767 = vmatprep.mubr.f32.mxu0 0.0
        %768 = vmatmul.mubr.f32.gmra.mxu0 %v690
        %v769 = vpop.f32.mrf.mxu0
        %v770 = vadd.f32 %v673, %v769
        %v771 = vpop.f32.mrf.mxu0
        %772 = vmatprep.mubr.f32.mxu0 0.0
        %773 = vmatmul.mubr.f32.gmra.mxu0 %v693
        %v774 = vpop.f32.mrf.mxu0
        %v775 = vadd.f32 %v678, %v774
        %v776 = vpop.f32.mrf.mxu0
        %777 = vmatprep.mubr.f32.mxu0 0.0
        %778 = vmatmul.mubr.f32.gmra.mxu0 %v696
        %v779 = vpop.f32.mrf.mxu0
        %v780 = vadd.f32 %v683, %v779
        %v781 = vpop.f32.mrf.mxu0
        %782 = vdwg.mxu0
        %783 = vst.msk [vmem:[#allocation2] sm:$0xff] %vm685, %v765
        %784 = vst.msk [vmem:[#allocation2 + $0x8] sm:$0xff] %vm685, %v770
        %785 = vst.msk [vmem:[#allocation2 + $0x10] sm:$0xff] %vm685, %v775
        %786 = vst.msk [vmem:[#allocation2 + $0x18] sm:$0xff] %vm685, %v780
        %v787 = vld [vmem:[%s582] sm:$0xff]
        %v788 = vld [vmem:[%s582 + $0x8] sm:$0xff]
        %v789 = vld [vmem:[%s582 + $0x10] sm:$0xff]
        %v790 = vld [vmem:[%s582 + $0x18] sm:$0xff]
        %v791 = vld [vmem:[%s577] sm:$0xff]
        %v792 = vld [vmem:[%s577 + $0x8] sm:$0xff]
        %v793 = vld [vmem:[%s587] sm:$0xff]
        %v794 = vld [vmem:[%s587 + $0x8] sm:$0xff]
        %v795 = vld [vmem:[%s587 + $0x10] sm:$0xff]
        %v796 = vld [vmem:[%s587 + $0x18] sm:$0xff]
        %798 = vset.pattern.permute.xlu0 0
        %799 = vperm.xlu0 %798, %v793
        %v800 = vpop.permute.xlu0 %799
        %803 = vset.pattern.permute.xlu0 0
        %804 = vperm.xlu0 %803, %v794
        %v805 = vpop.permute.xlu0 %804
        %808 = vset.pattern.permute.xlu0 0
        %809 = vperm.xlu0 %808, %v795
        %v810 = vpop.permute.xlu0 %809
        %813 = vset.pattern.permute.xlu0 0
        %814 = vperm.xlu0 %813, %v796
        %v815 = vpop.permute.xlu0 %814
        %v818 = vsel %vm685, %v787, 0
        %v821 = vsel %vm685, %v788, 0
        %v824 = vsel %vm685, %v789, 0
        %v827 = vsel %vm685, %v790, 0
        %829 = vmatprep.subr.mxu0 0.0
        %830 = vmatpush1.msra.mxu0 0.0
        %831 = vmatprep.subr.mxu0 0.0
        %832 = vmatpush1.msra.mxu0 0.0
        %833 = vmatprep.subr.mxu0 0.0
        %834 = vmatpush1.msra.mxu0 0.0
        %835 = vmatprep.subr.mxu0 0.0
        %836 = vmatpush1.msra.mxu0 0.0
        %837 = vmatprep.subr.mxu0 0.0
        %838 = vmatpush1.msra.mxu0 0.0
        %839 = vmatprep.subr.mxu0 0.0
        %840 = vmatpush1.msra.mxu0 0.0
        %841 = vmatprep.subr.mxu0 0.0
        %842 = vmatpush1.msra.mxu0 0.0
        %843 = vmatprep.subr.mxu0 0.0
        %844 = vmatpush1.msra.mxu0 0.0
        %845 = vmatprep.subr.mxu0 0.0
        %846 = vmatpush1.msra.mxu0 0.0
        %847 = vmatprep.subr.mxu0 0.0
        %848 = vmatpush1.msra.mxu0 0.0
        %849 = vmatprep.subr.mxu0 0.0
        %850 = vmatpush1.msra.mxu0 0.0
        %851 = vmatprep.subr.mxu0 0.0
        %852 = vmatpush1.msra.mxu0 0.0
        %853 = vmatprep.subr.mxu0 0.0
        %854 = vmatpush1.msra.mxu0 0.0
        %855 = vmatprep.subr.mxu0 0.0
        %856 = vmatpush1.msra.mxu0 0.0
        %857 = vmatprep.subr.mxu0 0.0
        %858 = vmatpush1.msra.mxu0 %v792
        %859 = vmatprep.subr.mxu0 0.0
        %860 = vmatpush1.msra.mxu0 %v791
        %861 = vmatprep.subr.mxu0 0.0
        %862 = vmatpush2.msra.mxu0 0.0
        %863 = vmatprep.subr.mxu0 0.0
        %864 = vmatpush2.msra.mxu0 0.0
        %865 = vmatprep.subr.mxu0 0.0
        %866 = vmatpush2.msra.mxu0 0.0
        %867 = vmatprep.subr.mxu0 0.0
        %868 = vmatpush2.msra.mxu0 0.0
        %869 = vmatprep.subr.mxu0 0.0
        %870 = vmatpush2.msra.mxu0 0.0
        %871 = vmatprep.subr.mxu0 0.0
        %872 = vmatpush2.msra.mxu0 0.0
        %873 = vmatprep.subr.mxu0 0.0
        %874 = vmatpush2.msra.mxu0 0.0
        %875 = vmatprep.subr.mxu0 0.0
        %876 = vmatpush2.msra.mxu0 0.0
        %877 = vmatprep.subr.mxu0 0.0
        %878 = vmatpush2.msra.mxu0 0.0
        %879 = vmatprep.subr.mxu0 0.0
        %880 = vmatpush2.msra.mxu0 0.0
        %881 = vmatprep.subr.mxu0 0.0
        %882 = vmatpush2.msra.mxu0 0.0
        %883 = vmatprep.subr.mxu0 0.0
        %884 = vmatpush2.msra.mxu0 0.0
        %885 = vmatprep.subr.mxu0 0.0
        %886 = vmatpush2.msra.mxu0 0.0
        %887 = vmatprep.subr.mxu0 0.0
        %888 = vmatpush2.msra.mxu0 0.0
        %889 = vmatprep.subr.mxu0 0.0
        %890 = vmatpush2.msra.mxu0 0.0
        %891 = vmatprep.subr.mxu0 0.0
        %892 = vmatpush2.msra.mxu0 0.0
        %893 = vmatprep.mubr.f32.mxu0 0.0
        %894 = vmatmul.mubr.f32.gmra.mxu0 %v818
        %v895 = vpop.f32.mrf.mxu0
        %v896 = vadd.f32 %v800, %v895
        %v897 = vpop.f32.mrf.mxu0
        %898 = vmatprep.mubr.f32.mxu0 0.0
        %899 = vmatmul.mubr.f32.gmra.mxu0 %v821
        %v900 = vpop.f32.mrf.mxu0
        %v901 = vadd.f32 %v805, %v900
        %v902 = vpop.f32.mrf.mxu0
        %903 = vmatprep.mubr.f32.mxu0 0.0
        %904 = vmatmul.mubr.f32.gmra.mxu0 %v824
        %v905 = vpop.f32.mrf.mxu0
        %v906 = vadd.f32 %v810, %v905
        %v907 = vpop.f32.mrf.mxu0
        %908 = vmatprep.mubr.f32.mxu0 0.0
        %909 = vmatmul.mubr.f32.gmra.mxu0 %v827
        %v910 = vpop.f32.mrf.mxu0
        %v911 = vadd.f32 %v815, %v910
        %v912 = vpop.f32.mrf.mxu0
        %913 = vdwg.mxu0
        %914 = vst.msk [vmem:[#allocation3] sm:$0xff] %vm685, %v896
        %915 = vst.msk [vmem:[#allocation3 + $0x8] sm:$0xff] %vm685, %v901
        %916 = vst.msk [vmem:[#allocation3 + $0x10] sm:$0xff] %vm685, %v906
        %917 = vst.msk [vmem:[#allocation3 + $0x18] sm:$0xff] %vm685, %v911
      $region68: #{atom_atom_affinities.1} parent=59 // pred_fallthru
        _
      %p918 = scmp.lt.s32.totalorder %s637, %s634
      // Predicated region
      $region69: #{atom_atom_affinities.1} parent=59 // pred_check
        %p919 = pneg %p918
      $region70: #{atom_atom_affinities.1} parent=59 // pred_check_branch
        %921 = sbr.rel (%p919) target = $region72
      $region71: #{atom_atom_affinities.1} parent=59 // pred_region
        %v922 = vld [vmem:[%s606] sm:$0xff]
        %v923 = vld [vmem:[%s606 + $0x8] sm:$0xff]
        %v924 = vld [vmem:[%s606 + $0x10] sm:$0xff]
        %v925 = vld [vmem:[%s606 + $0x18] sm:$0xff]
        %v926 = vld [vmem:[%s598] sm:$0xff]
        %v927 = vld [vmem:[%s598 + $0x8] sm:$0xff]
        %v928 = vld [vmem:[%s611] sm:$0xff]
        %v929 = vld [vmem:[%s611 + $0x8] sm:$0xff]
        %v930 = vld [vmem:[%s611 + $0x10] sm:$0xff]
        %v931 = vld [vmem:[%s611 + $0x18] sm:$0xff]
        %933 = vset.pattern.permute.xlu0 0
        %934 = vperm.xlu0 %933, %v928
        %v935 = vpop.permute.xlu0 %934
        %938 = vset.pattern.permute.xlu0 0
        %939 = vperm.xlu0 %938, %v929
        %v940 = vpop.permute.xlu0 %939
        %943 = vset.pattern.permute.xlu0 0
        %944 = vperm.xlu0 %943, %v930
        %v945 = vpop.permute.xlu0 %944
        %948 = vset.pattern.permute.xlu0 0
        %949 = vperm.xlu0 %948, %v931
        %v950 = vpop.permute.xlu0 %949
        %vm952 = vcmask 64512
        %v954 = vsel %vm952, %v922, 0
        %v957 = vsel %vm952, %v923, 0
        %v960 = vsel %vm952, %v924, 0
        %v963 = vsel %vm952, %v925, 0
        %965 = vmatprep.subr.mxu0 0.0
        %966 = vmatpush1.msra.mxu0 0.0
        %967 = vmatprep.subr.mxu0 0.0
        %968 = vmatpush1.msra.mxu0 0.0
        %969 = vmatprep.subr.mxu0 0.0
        %970 = vmatpush1.msra.mxu0 0.0
        %971 = vmatprep.subr.mxu0 0.0
        %972 = vmatpush1.msra.mxu0 0.0
        %973 = vmatprep.subr.mxu0 0.0
        %974 = vmatpush1.msra.mxu0 0.0
        %975 = vmatprep.subr.mxu0 0.0
        %976 = vmatpush1.msra.mxu0 0.0
        %977 = vmatprep.subr.mxu0 0.0
        %978 = vmatpush1.msra.mxu0 0.0
        %979 = vmatprep.subr.mxu0 0.0
        %980 = vmatpush1.msra.mxu0 0.0
        %981 = vmatprep.subr.mxu0 0.0
        %982 = vmatpush1.msra.mxu0 0.0
        %983 = vmatprep.subr.mxu0 0.0
        %984 = vmatpush1.msra.mxu0 0.0
        %985 = vmatprep.subr.mxu0 0.0
        %986 = vmatpush1.msra.mxu0 0.0
        %987 = vmatprep.subr.mxu0 0.0
        %988 = vmatpush1.msra.mxu0 0.0
        %989 = vmatprep.subr.mxu0 0.0
        %990 = vmatpush1.msra.mxu0 0.0
        %991 = vmatprep.subr.mxu0 0.0
        %992 = vmatpush1.msra.mxu0 0.0
        %993 = vmatprep.subr.mxu0 0.0
        %994 = vmatpush1.msra.mxu0 0.0
        %995 = vmatprep.subr.mxu0 %v927
        %996 = vmatpush1.msra.mxu0 %v926
        %997 = vmatprep.subr.mxu0 0.0
        %998 = vmatpush2.msra.mxu0 0.0
        %999 = vmatprep.subr.mxu0 0.0
        %1000 = vmatpush2.msra.mxu0 0.0
        %1001 = vmatprep.subr.mxu0 0.0
        %1002 = vmatpush2.msra.mxu0 0.0
        %1003 = vmatprep.subr.mxu0 0.0
        %1004 = vmatpush2.msra.mxu0 0.0
        %1005 = vmatprep.subr.mxu0 0.0
        %1006 = vmatpush2.msra.mxu0 0.0
        %1007 = vmatprep.subr.mxu0 0.0
        %1008 = vmatpush2.msra.mxu0 0.0
        %1009 = vmatprep.subr.mxu0 0.0
        %1010 = vmatpush2.msra.mxu0 0.0
        %1011 = vmatprep.subr.mxu0 0.0
        %1012 = vmatpush2.msra.mxu0 0.0
        %1013 = vmatprep.subr.mxu0 0.0
        %1014 = vmatpush2.msra.mxu0 0.0
        %1015 = vmatprep.subr.mxu0 0.0
        %1016 = vmatpush2.msra.mxu0 0.0
        %1017 = vmatprep.subr.mxu0 0.0
        %1018 = vmatpush2.msra.mxu0 0.0
        %1019 = vmatprep.subr.mxu0 0.0
        %1020 = vmatpush2.msra.mxu0 0.0
        %1021 = vmatprep.subr.mxu0 0.0
        %1022 = vmatpush2.msra.mxu0 0.0
        %1023 = vmatprep.subr.mxu0 0.0
        %1024 = vmatpush2.msra.mxu0 0.0
        %1025 = vmatprep.subr.mxu0 0.0
        %1026 = vmatpush2.msra.mxu0 0.0
        %1027 = vmatprep.subr.mxu0 0.0
        %1028 = vmatpush2.msra.mxu0 0.0
        %1029 = vmatprep.mubr.f32.mxu0 0.0
        %1030 = vmatmul.mubr.f32.gmra.mxu0 %v954
        %v1031 = vpop.f32.mrf.mxu0
        %v1032 = vadd.f32 %v935, %v1031
        %v1033 = vpop.f32.mrf.mxu0
        %v1034 = vadd.f32 %v935, %v1033
        %1035 = vmatprep.mubr.f32.mxu0 0.0
        %1036 = vmatmul.mubr.f32.gmra.mxu0 %v957
        %v1037 = vpop.f32.mrf.mxu0
        %v1038 = vadd.f32 %v940, %v1037
        %v1039 = vpop.f32.mrf.mxu0
        %v1040 = vadd.f32 %v940, %v1039
        %1041 = vmatprep.mubr.f32.mxu0 0.0
        %1042 = vmatmul.mubr.f32.gmra.mxu0 %v960
        %v1043 = vpop.f32.mrf.mxu0
        %v1044 = vadd.f32 %v945, %v1043
        %v1045 = vpop.f32.mrf.mxu0
        %v1046 = vadd.f32 %v945, %v1045
        %1047 = vmatprep.mubr.f32.mxu0 0.0
        %1048 = vmatmul.mubr.f32.gmra.mxu0 %v963
        %v1049 = vpop.f32.mrf.mxu0
        %v1050 = vadd.f32 %v950, %v1049
        %v1051 = vpop.f32.mrf.mxu0
        %v1052 = vadd.f32 %v950, %v1051
        %1053 = vdwg.mxu0
        %v1054 = vld [vmem:[%s622] sm:$0xf]
        %v1055 = vlaneseq
        %v1056 = vshrl.u32 %v1055, 7
        %v1057 = vadd.s32 %v1056, 8
        %v1058 = vlaneseq
        %v1059 = vshrl.u32 %v1058, 7
        %v1060 = vsub.s32 0, %v1059
        %v1061 = vrot.slane %v1054, %v1060
        %v1062 = vlaneseq
        %v1063 = vshrl.u32 %v1062, 7
        %v1064 = vsub.s32 2, %v1063
        %v1065 = vrot.slane %v1054, %v1064
        %v1066 = vlaneseq
        %v1067 = vshrl.u32 %v1066, 7
        %v1068 = vsub.s32 0, %v1067
        %v1069 = vrot.slane %v1061, %v1068
        %v1070 = vlaneseq
        %v1071 = vshrl.u32 %v1070, 7
        %v1072 = vsub.s32 0, %v1071
        %v1073 = vrot.slane %v1065, %v1072
        %vm1074 = vcmp.eq.s32.totalorder %v1056, %v1069
        %vm1075 = vcmp.eq.s32.totalorder %v1056, %v1073
        %vm1076 = vcmp.eq.s32.totalorder %v1057, %v1069
        %vm1077 = vcmp.eq.s32.totalorder %v1057, %v1073
        %v1078 = vsel %vm1074, 1, 0
        %v1079 = vsel %vm1075, 1, 0
        %v1080 = vsel %vm1076, 1, 0
        %v1081 = vsel %vm1077, 1, 0
        %v1082 = vcvt.s32.f32 %v1078
        %v1083 = vcvt.s32.f32 %v1079
        %v1084 = vcvt.s32.f32 %v1080
        %v1085 = vcvt.s32.f32 %v1081
        %v1086 = vlaneseq
        %v1087 = vshrl.u32 %v1086, 7
        %v1088 = vsub.s32 1, %v1087
        %v1089 = vrot.slane %v1054, %v1088
        %v1090 = vlaneseq
        %v1091 = vshrl.u32 %v1090, 7
        %v1092 = vsub.s32 3, %v1091
        %v1093 = vrot.slane %v1054, %v1092
        %v1094 = vlaneseq
        %v1095 = vshrl.u32 %v1094, 7
        %v1096 = vsub.s32 1, %v1095
        %v1097 = vrot.slane %v1089, %v1096
        %v1098 = vlaneseq
        %v1099 = vshrl.u32 %v1098, 7
        %v1100 = vsub.s32 1, %v1099
        %v1101 = vrot.slane %v1093, %v1100
        %vm1102 = vcmp.eq.s32.totalorder %v1056, %v1097
        %vm1103 = vcmp.eq.s32.totalorder %v1056, %v1101
        %vm1104 = vcmp.eq.s32.totalorder %v1057, %v1097
        %vm1105 = vcmp.eq.s32.totalorder %v1057, %v1101
        %v1106 = vsel %vm1102, 1, 0
        %v1107 = vsel %vm1103, 1, 0
        %v1108 = vsel %vm1104, 1, 0
        %v1109 = vsel %vm1105, 1, 0
        %v1110 = vcvt.s32.f32 %v1106
        %v1111 = vcvt.s32.f32 %v1107
        %v1112 = vcvt.s32.f32 %v1108
        %v1113 = vcvt.s32.f32 %v1109
        %v1114 = vld [vmem:[#allocation2] sm:$0xff]
        %v1115 = vld [vmem:[#allocation2 + $0x8] sm:$0xff]
        %v1116 = vld [vmem:[#allocation2 + $0x10] sm:$0xff]
        %v1117 = vld [vmem:[#allocation2 + $0x18] sm:$0xff]
        %vm1118 = vcmask 130048
        %v1120 = vsel %vm1118, %v1114, 0
        %v1123 = vsel %vm1118, %v1115, 0
        %v1126 = vsel %vm1118, %v1116, 0
        %v1129 = vsel %vm1118, %v1117, 0
        %1131 = vmatprep.subr.mxu0 0.0
        %1132 = vmatpush1.msra.mxu0 0.0
        %1133 = vmatprep.subr.mxu0 0.0
        %1134 = vmatpush1.msra.mxu0 0.0
        %1135 = vmatprep.subr.mxu0 0.0
        %1136 = vmatpush1.msra.mxu0 0.0
        %1137 = vmatprep.subr.mxu0 0.0
        %1138 = vmatpush1.msra.mxu0 0.0
        %1139 = vmatprep.subr.mxu0 0.0
        %1140 = vmatpush1.msra.mxu0 0.0
        %1141 = vmatprep.subr.mxu0 0.0
        %1142 = vmatpush1.msra.mxu0 0.0
        %1143 = vmatprep.subr.mxu0 0.0
        %1144 = vmatpush1.msra.mxu0 0.0
        %1145 = vmatprep.subr.mxu0 0.0
        %1146 = vmatpush1.msra.mxu0 0.0
        %1147 = vmatprep.subr.mxu0 0.0
        %1148 = vmatpush1.msra.mxu0 0.0
        %1149 = vmatprep.subr.mxu0 0.0
        %1150 = vmatpush1.msra.mxu0 0.0
        %1151 = vmatprep.subr.mxu0 0.0
        %1152 = vmatpush1.msra.mxu0 0.0
        %1153 = vmatprep.subr.mxu0 0.0
        %1154 = vmatpush1.msra.mxu0 0.0
        %1155 = vmatprep.subr.mxu0 0.0
        %1156 = vmatpush1.msra.mxu0 0.0
        %1157 = vmatprep.subr.mxu0 0.0
        %1158 = vmatpush1.msra.mxu0 0.0
        %1159 = vmatprep.subr.mxu0 %v1085
        %1160 = vmatpush1.msra.mxu0 %v1084
        %1161 = vmatprep.subr.mxu0 %v1083
        %1162 = vmatpush1.msra.mxu0 %v1082
        %1163 = vmatprep.subr.mxu0 0.0
        %1164 = vmatpush2.msra.mxu0 0.0
        %1165 = vmatprep.subr.mxu0 0.0
        %1166 = vmatpush2.msra.mxu0 0.0
        %1167 = vmatprep.subr.mxu0 0.0
        %1168 = vmatpush2.msra.mxu0 0.0
        %1169 = vmatprep.subr.mxu0 0.0
        %1170 = vmatpush2.msra.mxu0 0.0
        %1171 = vmatprep.subr.mxu0 0.0
        %1172 = vmatpush2.msra.mxu0 0.0
        %1173 = vmatprep.subr.mxu0 0.0
        %1174 = vmatpush2.msra.mxu0 0.0
        %1175 = vmatprep.subr.mxu0 0.0
        %1176 = vmatpush2.msra.mxu0 0.0
        %1177 = vmatprep.subr.mxu0 0.0
        %1178 = vmatpush2.msra.mxu0 0.0
        %1179 = vmatprep.subr.mxu0 0.0
        %1180 = vmatpush2.msra.mxu0 0.0
        %1181 = vmatprep.subr.mxu0 0.0
        %1182 = vmatpush2.msra.mxu0 0.0
        %1183 = vmatprep.subr.mxu0 0.0
        %1184 = vmatpush2.msra.mxu0 0.0
        %1185 = vmatprep.subr.mxu0 0.0
        %1186 = vmatpush2.msra.mxu0 0.0
        %1187 = vmatprep.subr.mxu0 0.0
        %1188 = vmatpush2.msra.mxu0 0.0
        %1189 = vmatprep.subr.mxu0 0.0
        %1190 = vmatpush2.msra.mxu0 0.0
        %1191 = vmatprep.subr.mxu0 0.0
        %1192 = vmatpush2.msra.mxu0 0.0
        %1193 = vmatprep.subr.mxu0 0.0
        %1194 = vmatpush2.msra.mxu0 0.0
        %1195 = vmatprep.mubr.f32.mxu0 0.0
        %1196 = vmatmul.mubr.f32.gmra.mxu0 %v1120
        %v1197 = vpop.f32.mrf.mxu0
        %v1198 = vadd.f32 0.0, %v1197
        %v1199 = vpop.f32.mrf.mxu0
        %v1200 = vadd.f32 0.0, %v1199
        %1201 = vmatprep.mubr.f32.mxu0 0.0
        %1202 = vmatmul.mubr.f32.gmra.mxu0 %v1123
        %v1203 = vpop.f32.mrf.mxu0
        %v1204 = vadd.f32 0.0, %v1203
        %v1205 = vpop.f32.mrf.mxu0
        %v1206 = vadd.f32 0.0, %v1205
        %1207 = vmatprep.mubr.f32.mxu0 0.0
        %1208 = vmatmul.mubr.f32.gmra.mxu0 %v1126
        %v1209 = vpop.f32.mrf.mxu0
        %v1210 = vadd.f32 0.0, %v1209
        %v1211 = vpop.f32.mrf.mxu0
        %v1212 = vadd.f32 0.0, %v1211
        %1213 = vmatprep.mubr.f32.mxu0 0.0
        %1214 = vmatmul.mubr.f32.gmra.mxu0 %v1129
        %v1215 = vpop.f32.mrf.mxu0
        %v1216 = vadd.f32 0.0, %v1215
        %v1217 = vpop.f32.mrf.mxu0
        %v1218 = vadd.f32 0.0, %v1217
        %1219 = vdwg.mxu0
        %v1220 = vld [vmem:[#allocation3] sm:$0xff]
        %v1221 = vld [vmem:[#allocation3 + $0x8] sm:$0xff]
        %v1222 = vld [vmem:[#allocation3 + $0x10] sm:$0xff]
        %v1223 = vld [vmem:[#allocation3 + $0x18] sm:$0xff]
        %v1225 = vsel %vm1118, %v1220, 0
        %v1228 = vsel %vm1118, %v1221, 0
        %v1231 = vsel %vm1118, %v1222, 0
        %v1234 = vsel %vm1118, %v1223, 0
        %1236 = vmatprep.subr.mxu0 0.0
        %1237 = vmatpush1.msra.mxu0 0.0
        %1238 = vmatprep.subr.mxu0 0.0
        %1239 = vmatpush1.msra.mxu0 0.0
        %1240 = vmatprep.subr.mxu0 0.0
        %1241 = vmatpush1.msra.mxu0 0.0
        %1242 = vmatprep.subr.mxu0 0.0
        %1243 = vmatpush1.msra.mxu0 0.0
        %1244 = vmatprep.subr.mxu0 0.0
        %1245 = vmatpush1.msra.mxu0 0.0
        %1246 = vmatprep.subr.mxu0 0.0
        %1247 = vmatpush1.msra.mxu0 0.0
        %1248 = vmatprep.subr.mxu0 0.0
        %1249 = vmatpush1.msra.mxu0 0.0
        %1250 = vmatprep.subr.mxu0 0.0
        %1251 = vmatpush1.msra.mxu0 0.0
        %1252 = vmatprep.subr.mxu0 0.0
        %1253 = vmatpush1.msra.mxu0 0.0
        %1254 = vmatprep.subr.mxu0 0.0
        %1255 = vmatpush1.msra.mxu0 0.0
        %1256 = vmatprep.subr.mxu0 0.0
        %1257 = vmatpush1.msra.mxu0 0.0
        %1258 = vmatprep.subr.mxu0 0.0
        %1259 = vmatpush1.msra.mxu0 0.0
        %1260 = vmatprep.subr.mxu0 0.0
        %1261 = vmatpush1.msra.mxu0 0.0
        %1262 = vmatprep.subr.mxu0 0.0
        %1263 = vmatpush1.msra.mxu0 0.0
        %1264 = vmatprep.subr.mxu0 %v1113
        %1265 = vmatpush1.msra.mxu0 %v1112
        %1266 = vmatprep.subr.mxu0 %v1111
        %1267 = vmatpush1.msra.mxu0 %v1110
        %1268 = vmatprep.subr.mxu0 0.0
        %1269 = vmatpush2.msra.mxu0 0.0
        %1270 = vmatprep.subr.mxu0 0.0
        %1271 = vmatpush2.msra.mxu0 0.0
        %1272 = vmatprep.subr.mxu0 0.0
        %1273 = vmatpush2.msra.mxu0 0.0
        %1274 = vmatprep.subr.mxu0 0.0
        %1275 = vmatpush2.msra.mxu0 0.0
        %1276 = vmatprep.subr.mxu0 0.0
        %1277 = vmatpush2.msra.mxu0 0.0
        %1278 = vmatprep.subr.mxu0 0.0
        %1279 = vmatpush2.msra.mxu0 0.0
        %1280 = vmatprep.subr.mxu0 0.0
        %1281 = vmatpush2.msra.mxu0 0.0
        %1282 = vmatprep.subr.mxu0 0.0
        %1283 = vmatpush2.msra.mxu0 0.0
        %1284 = vmatprep.subr.mxu0 0.0
        %1285 = vmatpush2.msra.mxu0 0.0
        %1286 = vmatprep.subr.mxu0 0.0
        %1287 = vmatpush2.msra.mxu0 0.0
        %1288 = vmatprep.subr.mxu0 0.0
        %1289 = vmatpush2.msra.mxu0 0.0
        %1290 = vmatprep.subr.mxu0 0.0
        %1291 = vmatpush2.msra.mxu0 0.0
        %1292 = vmatprep.subr.mxu0 0.0
        %1293 = vmatpush2.msra.mxu0 0.0
        %1294 = vmatprep.subr.mxu0 0.0
        %1295 = vmatpush2.msra.mxu0 0.0
        %1296 = vmatprep.subr.mxu0 0.0
        %1297 = vmatpush2.msra.mxu0 0.0
        %1298 = vmatprep.subr.mxu0 0.0
        %1299 = vmatpush2.msra.mxu0 0.0
        %1300 = vmatprep.mubr.f32.mxu0 0.0
        %1301 = vmatmul.mubr.f32.gmra.mxu0 %v1225
        %v1302 = vpop.f32.mrf.mxu0
        %v1303 = vadd.f32 0.0, %v1302
        %v1304 = vpop.f32.mrf.mxu0
        %v1305 = vadd.f32 0.0, %v1304
        %1306 = vmatprep.mubr.f32.mxu0 0.0
        %1307 = vmatmul.mubr.f32.gmra.mxu0 %v1228
        %v1308 = vpop.f32.mrf.mxu0
        %v1309 = vadd.f32 0.0, %v1308
        %v1310 = vpop.f32.mrf.mxu0
        %v1311 = vadd.f32 0.0, %v1310
        %1312 = vmatprep.mubr.f32.mxu0 0.0
        %1313 = vmatmul.mubr.f32.gmra.mxu0 %v1231
        %v1314 = vpop.f32.mrf.mxu0
        %v1315 = vadd.f32 0.0, %v1314
        %v1316 = vpop.f32.mrf.mxu0
        %v1317 = vadd.f32 0.0, %v1316
        %1318 = vmatprep.mubr.f32.mxu0 0.0
        %1319 = vmatmul.mubr.f32.gmra.mxu0 %v1234
        %v1320 = vpop.f32.mrf.mxu0
        %v1321 = vadd.f32 0.0, %v1320
        %v1322 = vpop.f32.mrf.mxu0
        %v1323 = vadd.f32 0.0, %v1322
        %1324 = vdwg.mxu0
        %v1325 = vld [vmem:[#allocation4] sm:$0xff]
        %v1326 = vld [vmem:[#allocation4 + $0x8] sm:$0xff]
        %v1327 = vld [vmem:[#allocation4 + $0x10] sm:$0xff]
        %v1328 = vld [vmem:[#allocation4 + $0x18] sm:$0xff]
        %v1329 = vld [vmem:[#allocation4 + $0x20] sm:$0xff]
        %v1330 = vld [vmem:[#allocation4 + $0x28] sm:$0xff]
        %v1331 = vld [vmem:[#allocation4 + $0x30] sm:$0xff]
        %v1332 = vld [vmem:[#allocation4 + $0x38] sm:$0xff]
        %v1333 = vmul.f32 %v1032, %v1198
        %v1334 = vmul.f32 %v1034, %v1200
        %v1335 = vmul.f32 %v1038, %v1204
        %v1336 = vmul.f32 %v1040, %v1206
        %v1337 = vmul.f32 %v1044, %v1210
        %v1338 = vmul.f32 %v1046, %v1212
        %v1339 = vmul.f32 %v1050, %v1216
        %v1340 = vmul.f32 %v1052, %v1218
        %v1341 = vmul.f32 %v1333, %v1303
        %v1342 = vmul.f32 %v1334, %v1305
        %v1343 = vmul.f32 %v1335, %v1309
        %v1344 = vmul.f32 %v1336, %v1311
        %v1345 = vmul.f32 %v1337, %v1315
        %v1346 = vmul.f32 %v1338, %v1317
        %v1347 = vmul.f32 %v1339, %v1321
        %v1348 = vmul.f32 %v1340, %v1323
        %v1349 = vadd.f32 %v1325, %v1341
        %v1350 = vadd.f32 %v1326, %v1342
        %v1351 = vadd.f32 %v1327, %v1343
        %v1352 = vadd.f32 %v1328, %v1344
        %v1353 = vadd.f32 %v1329, %v1345
        %v1354 = vadd.f32 %v1330, %v1346
        %v1355 = vadd.f32 %v1331, %v1347
        %v1356 = vadd.f32 %v1332, %v1348
        %1357 = vst [vmem:[#allocation4] sm:$0xff] %v1349
        %1358 = vst [vmem:[#allocation4 + $0x8] sm:$0xff] %v1350
        %1359 = vst [vmem:[#allocation4 + $0x10] sm:$0xff] %v1351
        %1360 = vst [vmem:[#allocation4 + $0x18] sm:$0xff] %v1352
        %1361 = vst [vmem:[#allocation4 + $0x20] sm:$0xff] %v1353
        %1362 = vst [vmem:[#allocation4 + $0x28] sm:$0xff] %v1354
        %1363 = vst [vmem:[#allocation4 + $0x30] sm:$0xff] %v1355
        %1364 = vst [vmem:[#allocation4 + $0x38] sm:$0xff] %v1356
      $region72: #{atom_atom_affinities.1} parent=59 // pred_fallthru
        _
      %p1365 = scmp.eq.s32.totalorder %s35, 1
      // Predicated region
      $region73: #{atom_atom_affinities.1} parent=59 // pred_check
        %p1366 = pneg %p1365
      $region74: #{atom_atom_affinities.1} parent=59 // pred_check_branch
        %1368 = sbr.rel (%p1366) target = $region76
      $region75: #{atom_atom_affinities.1} parent=59 // pred_region
        %v1369 = vld [vmem:[#allocation4] sm:$0xff]
        %v1370 = vld [vmem:[#allocation4 + $0x8] sm:$0xff]
        %v1371 = vld [vmem:[#allocation4 + $0x10] sm:$0xff]
        %v1372 = vld [vmem:[#allocation4 + $0x18] sm:$0xff]
        %v1373 = vld [vmem:[#allocation4 + $0x20] sm:$0xff]
        %v1374 = vld [vmem:[#allocation4 + $0x28] sm:$0xff]
        %v1375 = vld [vmem:[#allocation4 + $0x30] sm:$0xff]
        %v1376 = vld [vmem:[#allocation4 + $0x38] sm:$0xff]
        %v1377 = vadd.f32 %v1369, %v1370
        %v1378 = vadd.f32 %v1377, %v1371
        %v1379 = vadd.f32 %v1378, %v1372
        %v1380 = vadd.f32 %v1379, %v1373
        %v1381 = vadd.f32 %v1380, %v1374
        %v1382 = vadd.f32 %v1381, %v1375
        %v1383 = vadd.f32 %v1382, %v1376
        %1384 = vadd.xlane.f32.xlu0 %v1383
        %v1385 = vpop.xlane.xlu0 %1384
        %v1386 = vrot.slane %v1385, 4
        %v1387 = vadd.f32 %v1385, %v1386
        %v1388 = vrot.slane %v1387, 2
        %v1389 = vadd.f32 %v1387, %v1388
        %v1390 = vrot.slane %v1389, 1
        %v1391 = vadd.f32 %v1389, %v1390
        %s1392 = vtos %v1391
        %v1393 = vstv %s1392
        %v1394 = vadd.f32 %v1393, 0.0
        %1395 = vst [vmem:[%s633] sm:$0xff] %v1394
      $region76: #{atom_atom_affinities.1} parent=59 // pred_fallthru
        _
      %p1396 = scmp.lt.s32.totalorder %s33, 1
      %s1397 = scalar_select %p1396, %s33, 1
      %p1398 = scmp.lt.s32.totalorder %s34, 1
      %s1399 = scalar_select %p1398, %s34, 1
      %s1400 = smul.addr %s1397, 2
      %s1401 = sadd.s32 %s1399, %s1400
      %s1402 = smul.addr %s1401, 8
      %s1403 = scalar_lea.vmem %s11, %s1402
      // Predicated region
      $region77: #{atom_atom_affinities.1} parent=59 // pred_check
        %p1404 = pneg %p339
      $region78: #{atom_atom_affinities.1} parent=59 // pred_check_branch
        %1406 = sbr.rel (%p1404) target = $region80
      $region79: #{atom_atom_affinities.1} parent=59 // pred_region
        _
      $region80: #{atom_atom_affinities.1} parent=59 // pred_fallthru
        _
    $region60: #{atom_atom_affinities.1} parent=5 // pred_fallthru
      _
    %p1407 = scmp.le.s32.totalorder 2, %s23
    // Predicated region
    $region81: #{atom_atom_affinities.1} parent=5 // pred_check
      %p1408 = pneg %p1407
    $region82: #{atom_atom_affinities.1} parent=5 // pred_check_branch
      %1410 = sbr.rel (%p1408) target = $region84
    $region83: #{atom_atom_affinities.1} parent=5 // pred_region
      %s1411 = ssub.s32 %s23, 2
      // Predicated region
      $region85: #{atom_atom_affinities.1} parent=83 // pred_check
        %p1412 = pneg %p345
      $region86: #{atom_atom_affinities.1} parent=83 // pred_check_branch
        %1414 = sbr.rel (%p1412) target = $region88
      $region87: #{atom_atom_affinities.1} parent=83 // pred_region
        %p1415 = scmp.lt.s32.totalorder %s36, 1
        %s1416 = scalar_select %p1415, %s36, 1
        %p1417 = scmp.lt.s32.totalorder %s37, 1
        %s1418 = scalar_select %p1417, %s37, 1
        %s1419 = smul.addr %s1416, 2
        %s1420 = sadd.s32 %s1418, %s1419
        %s1421 = smul.addr %s1420, 8
        %s1422 = scalar_lea.vmem %s11, %s1421
      $region88: #{atom_atom_affinities.1} parent=83 // pred_fallthru
        _
    $region84: #{atom_atom_affinities.1} parent=5 // pred_fallthru
      _
  $region6: #{atom_atom_affinities.1} parent=0 // loop_footer
    %s27 = sadd.s32 1, %s23
  $region7: #{atom_atom_affinities.1} parent=0 // loop_footer_branch
    %22 = sbr.rel target = $region3
  $region8: #{atom_atom_affinities.1} parent=0 // loop_exit
    _

</llo_original>
